<compile_context>
chip_gen: v7x
topology: tpu7x:2x2x1
jax: 0.10.0
libtpu: 0.0.40
codegen_flags: <defaults>
</compile_context>

<pallas_src>
import functools

import jax
import jax.numpy as jnp
from jax.experimental import pallas as pl
from jax.experimental.pallas import tpu as pltpu


N_LANE = 128   # lane-dense logits slab width (real n_labels sliced out in the wrapper)
M_CAP = 2048   # max conv rows (tile_b * l_pad) processed per grid step (VMEM budget guard)


def _round_up(x, m):
    return (x + m - 1) // m * m


def _pick_tile_b(batch, l_pad):
    """Batch rows per grid step: big enough to amortize per-step overhead, >=2 steps for B>8."""
    cap = max(8, (M_CAP // l_pad) // 8 * 8)
    b8 = _round_up(max(batch, 1), 8)
    if b8 <= 8:
        tile = 8
    else:
        tile = _round_up((b8 + 1) // 2, 8)   # keep >= 2 grid steps (v7x megacore)
    return int(max(8, min(tile, cap, 256)))


# ---------------------------------------------------------------------------
# Fused kernel: one-hot gather + per-tap conv matmuls + bias + ReLU
#               + static 0-mask + max-pool + final Linear
# ---------------------------------------------------------------------------
def _fused_cnn_kernel(ids_ref, tbl_ref, wt_ref, bias_ref, fcw_ref, fcb_ref, out_ref, *,
                      kernel_heights, seq_len, l_pad, tile_b, out_channels):
    # ids_ref : (kh_max, M, 1)      int32   M = tile_b * l_pad, tap-j-shifted id columns
    # tbl_ref : (vocab_pad, E)      bf16    embedding table (zero rows past vocab)
    # wt_ref  : (kh_max, E, Ct)     bf16    per-tap conv weights (zero for taps >= kh of a branch)
    # bias_ref: (1, Ct)             f32
    # fcw_ref : (Ct, N_LANE)        bf16
    # fcb_ref : (1, N_LANE)         f32
    # out_ref : (tile_b, N_LANE)    f32
    kh_max = max(kernel_heights)
    vocab_pad = tbl_ref.shape[0]
    ct = wt_ref.shape[-1]
    m = tile_b * l_pad

    tbl = tbl_ref[...]                                                     # (V, E) bf16
    v_iota = jax.lax.broadcasted_iota(jnp.int32, (m, vocab_pad), 1)

    # Gather + conv, fused: for tap j, one-hot(ids shifted by j) @ table selects the shifted
    # embedding rows (exact for a bf16 table), then (M, E) @ (E, Ct) accumulates that tap's
    # contribution.  All shifting happened on the tiny int32 ids in the wrapper, so the kernel
    # only touches aligned, lane-dense blocks (no sublane-misaligned slices, no lane concats).
    acc = jnp.zeros((m, ct), jnp.float32)
    for j in range(kh_max):
        onehot = jnp.where(v_iota == ids_ref[j], 1.0, 0.0).astype(jnp.bfloat16)   # (M, V)
        emb_j = jnp.dot(onehot, tbl, preferred_element_type=jnp.float32)          # (M, E) f32
        acc = acc + jnp.dot(emb_j.astype(jnp.bfloat16), wt_ref[j],
                            preferred_element_type=jnp.float32)                   # (M, Ct)

    act = jnp.maximum(acc + bias_ref[...], 0.0)                                   # bias + ReLU (f32)

    # Compile-time validity mask: branch i (height kh) is valid for t < seq_len - kh + 1.
    # Post-ReLU activations are >= 0 and every branch has >= 1 valid position, so 0.0-fill is exact.
    t_io = jax.lax.broadcasted_iota(jnp.int32, (l_pad, ct), 0)
    c_io = jax.lax.broadcasted_iota(jnp.int32, (l_pad, ct), 1)
    valid = None
    for i, kh in enumerate(kernel_heights):
        branch = ((c_io >= i * out_channels) & (c_io < (i + 1) * out_channels)
                  & (t_io < seq_len - kh + 1))
        valid = branch if valid is None else (valid | branch)
    mask = jnp.where(valid, 1.0, 0.0)                                             # (l_pad, Ct) f32

    # Masked max-pool over time (sublane reduce), then the fused final Linear into a
    # lane-dense (tile_b, 128) slab.
    feats = jnp.max(act.reshape(tile_b, l_pad, ct) * mask, axis=1)                # (tile_b, Ct)
    out_ref[...] = (
        jnp.dot(feats.astype(jnp.bfloat16), fcw_ref[...],
                preferred_element_type=jnp.float32)
        + fcb_ref[...]
    )


# ---------------------------------------------------------------------------
# Forward pass
# ---------------------------------------------------------------------------
def cnn_model_forward(token_ids, params, kernel_heights):
    B, L = token_ids.shape
    kernel_heights = tuple(kernel_heights)
    kh_max = max(kernel_heights)
    assert L >= kh_max, "sequence length must be >= the largest conv kernel height"

    tbl = params["embedding_padded"]          # (vocab_pad, E) bf16
    wt = params["w_taps"]                     # (kh_max, E, Ct) bf16
    bp = params["b_packed"]                   # (1, Ct) f32
    fcw = params["fc_w_pad"]                  # (Ct, N_LANE) bf16
    fcb = params["fc_b_pad"]                  # (1, N_LANE) f32
    vocab_pad, E = tbl.shape
    Ct = wt.shape[-1]
    C = Ct // len(kernel_heights)

    # Small-vocab fused-gather path only (table + one-hot live comfortably in VMEM).
    # TODO(synk): for large vocabularies, replace the one-hot matmul with a
    #             PrefetchScalarGridSpec / make_async_copy row-gather of the HBM table.
    assert vocab_pad * E * 2 <= 4 * 1024 * 1024, "small-vocab fused-gather path only"

    l_pad = _round_up(L, 8)
    tile_b = _pick_tile_b(B, l_pad)
    B_pad = _round_up(B, tile_b)
    M = tile_b * l_pad

    # Dropout is identity at inference.
    # TODO(synk): training-mode dropout (on embeddings and pooled features) is not implemented.

    # Build per-tap shifted id columns in the wrapper (tiny int32 ops; pad positions only ever
    # feed masked conv rows, so their value is irrelevant).
    ids = jnp.pad(token_ids.astype(jnp.int32),
                  ((0, B_pad - B), (0, l_pad + kh_max - 1 - L)))
    ids_taps = jnp.stack([ids[:, j:j + l_pad] for j in range(kh_max)], axis=0)
    ids_col = ids_taps.reshape(kh_max, B_pad * l_pad, 1)

    grid = (B_pad // tile_b,)
    kernel = functools.partial(
        _fused_cnn_kernel,
        kernel_heights=kernel_heights, seq_len=L, l_pad=l_pad,
        tile_b=tile_b, out_channels=C)

    out = pl.pallas_call(
        kernel,
        out_shape=jax.ShapeDtypeStruct((B_pad, N_LANE), jnp.float32),
        grid=grid,
        in_specs=[
            pl.BlockSpec((kh_max, M, 1), lambda b: (0, b, 0)),   # shifted id columns
            pl.BlockSpec(tbl.shape, lambda b: (0, 0)),           # embedding table
            pl.BlockSpec(wt.shape, lambda b: (0, 0, 0)),         # per-tap conv weights
            pl.BlockSpec(bp.shape, lambda b: (0, 0)),            # conv bias
            pl.BlockSpec(fcw.shape, lambda b: (0, 0)),           # fc weight
            pl.BlockSpec(fcb.shape, lambda b: (0, 0)),           # fc bias
        ],
        out_specs=pl.BlockSpec((tile_b, N_LANE), lambda b: (b, 0)),
        compiler_params=pltpu.CompilerParams(dimension_semantics=("parallel",)),
    )(ids_col, tbl, wt, bp, fcw, fcb)

    return out[:B, :params["n_labels"]]


# ---------------------------------------------------------------------------
# Pure-JAX reference (same bf16 quantization points as the kernel)
# ---------------------------------------------------------------------------
def _reference_forward(token_ids, params, kernel_heights):
    tbl = params["embedding_padded"]
    wt = params["w_taps"]
    bp = params["b_packed"]
    fcw = params["fc_w_pad"]
    fcb = params["fc_b_pad"]
    B, L = token_ids.shape
    Ct = wt.shape[-1]
    C = Ct // len(kernel_heights)

    emb = tbl[token_ids]                                              # (B, L, E) bf16
    feats = []
    for i, kh in enumerate(kernel_heights):
        w_i = wt[:kh, :, i * C:(i + 1) * C]                           # (kh, E, C) bf16
        t_out = L - kh + 1
        win = jnp.stack([emb[:, j:j + t_out, :] for j in range(kh)], axis=2)   # (B, t_out, kh, E)
        pre = jnp.einsum('btje,jec->btc', win, w_i,
                         preferred_element_type=jnp.float32)
        act = jnp.maximum(pre + bp[:, i * C:(i + 1) * C], 0.0)
        feats.append(jnp.max(act, axis=1))                            # (B, C)
    f = jnp.concatenate(feats, axis=1)                                # (B, Ct)
    logits = jnp.dot(f.astype(jnp.bfloat16), fcw,
                     preferred_element_type=jnp.float32) + fcb
    return logits[:, :params["n_labels"]]


# ---------------------------------------------------------------------------
# Deterministic parameter construction (synthetic, pre-packed for the kernel)
# ---------------------------------------------------------------------------
def make_params(key, vocab_size, embedding_dim, out_channels, kernel_heights, n_labels):
    kernel_heights = tuple(kernel_heights)
    kh_max = max(kernel_heights)
    n_br = len(kernel_heights)
    keys = jax.random.split(key, 3 + 2 * n_br)

    embedding = jax.random.normal(keys[0], (vocab_size, embedding_dim), jnp.float32) * 0.1
    vocab_pad = _round_up(vocab_size, 128)
    emb_pad = jnp.zeros((vocab_pad, embedding_dim), jnp.float32).at[:vocab_size].set(embedding)

    # Pack all conv branches into per-tap weights (kh_max, E, n_br*C); taps >= kh of a branch
    # are zero, so those taps contribute exactly nothing to that branch's columns.
    Ct = n_br * out_channels
    w_taps = jnp.zeros((kh_max, embedding_dim, Ct), jnp.float32)
    b_packed = jnp.zeros((1, Ct), jnp.float32)
    for i, kh in enumerate(kernel_heights):
        # PyTorch Conv2d weight (C, 1, kh, E) -> per-tap layout (kh, E, C)
        w_torch = jax.random.normal(
            keys[1 + 2 * i], (out_channels, 1, kh, embedding_dim), jnp.float32) * 0.05
        w_k = jnp.transpose(w_torch[:, 0], (1, 2, 0))                 # (kh, E, C)
        b = jax.random.normal(keys[2 + 2 * i], (1, out_channels), jnp.float32) * 0.05
        sl = slice(i * out_channels, (i + 1) * out_channels)
        w_taps = w_taps.at[:kh, :, sl].set(w_k)
        b_packed = b_packed.at[:, sl].set(b)

    # Final Linear: PyTorch weight is (n_labels, fc_in); store the transpose, lane-pad to 128.
    fc_w = jax.random.normal(keys[-2], (Ct, n_labels), jnp.float32) * 0.05
    fc_b = jax.random.normal(keys[-1], (n_labels,), jnp.float32) * 0.05
    fc_w_pad = jnp.zeros((Ct, N_LANE), jnp.float32).at[:, :n_labels].set(fc_w)
    fc_b_pad = jnp.zeros((1, N_LANE), jnp.float32).at[:, :n_labels].set(fc_b)

    return {
        "embedding_padded": emb_pad.astype(jnp.bfloat16),   # bf16 MXU inputs, f32 accumulation
        "w_taps": w_taps.astype(jnp.bfloat16),
        "b_packed": b_packed,
        "fc_w_pad": fc_w_pad.astype(jnp.bfloat16),
        "fc_b_pad": fc_b_pad,
        "n_labels": n_labels,
    }


if __name__ == "__main__":
    # Small shapes consistent with the module's forward pass
    # (in_channels=1, stride=1, padding=0, as in the reference model).
    B, L = 2, 16
    vocab_size = 64
    embedding_dim = 32
    out_channels = 16
    kernel_heights = (3, 4, 5)
    n_labels = 2

    key = jax.random.PRNGKey(0)
    pkey, xkey = jax.random.split(key)
    params = make_params(pkey, vocab_size, embedding_dim, out_channels,
                         kernel_heights, n_labels)
    token_ids = jax.random.randint(xkey, (B, L), 0, vocab_size, dtype=jnp.int32)

    logits = cnn_model_forward(token_ids, params, kernel_heights)
    jax.block_until_ready(logits)
    assert logits.shape == (B, n_labels)

    ref = _reference_forward(token_ids, params, kernel_heights)
    err = float(jnp.max(jnp.abs(logits - ref)))
    assert err < 5e-3, f"kernel/reference mismatch: max abs err {err}"

    print("KERNEL_OK")
</pallas_src>

<mosaic_0001>
module attributes {stable_mosaic.version = 11 : i64} {
  func.func @_fused_cnn_kernel(%arg0: i32, %arg1: memref<5x128x1xi32, #tpu.memory_space<vmem>>, %arg2: memref<128x32xbf16, #tpu.memory_space<vmem>>, %arg3: memref<5x32x48xbf16, #tpu.memory_space<vmem>>, %arg4: memref<1x48xf32, #tpu.memory_space<vmem>>, %arg5: memref<48x128xbf16, #tpu.memory_space<vmem>>, %arg6: memref<1x128xf32, #tpu.memory_space<vmem>>, %arg7: memref<8x128xf32, #tpu.memory_space<vmem>>) attributes {dimension_semantics = [#tpu.dimension_semantics<parallel>], iteration_bounds = array<i64: 1>, scalar_prefetch = 0 : i64, scratch_operands = 0 : i64, tpu.core_type = #tpu.core_type<tc>, window_params = [{transform_indices = @transform_0, window_bounds = array<i64: 5, 128, 1>}, {pipeline_mode = #tpu.pipeline_mode<synchronous>, transform_indices = @transform_1, window_bounds = array<i64: 128, 32>}, {pipeline_mode = #tpu.pipeline_mode<synchronous>, transform_indices = @transform_2, window_bounds = array<i64: 5, 32, 48>}, {pipeline_mode = #tpu.pipeline_mode<synchronous>, transform_indices = @transform_3, window_bounds = array<i64: 1, 48>}, {pipeline_mode = #tpu.pipeline_mode<synchronous>, transform_indices = @transform_4, window_bounds = array<i64: 48, 128>}, {pipeline_mode = #tpu.pipeline_mode<synchronous>, transform_indices = @transform_5, window_bounds = array<i64: 1, 128>}, {transform_indices = @transform_6, window_bounds = array<i64: 8, 128>}]} {
    %c0 = arith.constant 0 : index
    %c0_0 = arith.constant 0 : index
    %0 = vector.load %arg2[%c0, %c0_0] : memref<128x32xbf16, #tpu.memory_space<vmem>>, vector<128x32xbf16>
    %1 = tpu.iota {dimensions = array<i32: 1>} : vector<128x128xi32>
    %cst = arith.constant 0.000000e+00 : f32
    %2 = vector.broadcast %cst : f32 to vector<128x48xf32>
    %c0_1 = arith.constant 0 : index
    %c0_2 = arith.constant 0 : index
    %c0_3 = arith.constant 0 : index
    %3 = vector.load %arg1[%c0_1, %c0_2, %c0_3] : memref<5x128x1xi32, #tpu.memory_space<vmem>>, vector<1x128x1xi32>
    %4 = vector.shape_cast %3 : vector<1x128x1xi32> to vector<128x1xi32>
    %5 = vector.broadcast %4 : vector<128x1xi32> to vector<128x128xi32>
    %6 = arith.cmpi eq, %1, %5 : vector<128x128xi32>
    %cst_4 = arith.constant 1.000000e+00 : f32
    %cst_5 = arith.constant 0.000000e+00 : f32
    %7 = vector.broadcast %cst_4 : f32 to vector<128x128xf32>
    %8 = vector.broadcast %cst_5 : f32 to vector<128x128xf32>
    %9 = arith.select %6, %7, %8 : vector<128x128xi1>, vector<128x128xf32>
    %10 = arith.truncf %9 : vector<128x128xf32> to vector<128x128xbf16>
    %cst_6 = arith.constant dense<0.000000e+00> : vector<128x32xf32>
    %11 = tpu.matmul %10, %0, %cst_6 {dimension_numbers = #tpu.dot_dimension_numbers<[1], [0], [0], [1], [0, 0, 1, 1], [], []>} : vector<128x128xbf16>, vector<128x32xbf16>, vector<128x32xf32> -> vector<128x32xf32>
    %12 = arith.truncf %11 : vector<128x32xf32> to vector<128x32xbf16>
    %c0_7 = arith.constant 0 : index
    %c0_8 = arith.constant 0 : index
    %c0_9 = arith.constant 0 : index
    %13 = vector.load %arg3[%c0_7, %c0_8, %c0_9] : memref<5x32x48xbf16, #tpu.memory_space<vmem>>, vector<1x32x48xbf16>
    %14 = vector.shape_cast %13 : vector<1x32x48xbf16> to vector<32x48xbf16>
    %cst_10 = arith.constant dense<0.000000e+00> : vector<128x48xf32>
    %15 = tpu.matmul %12, %14, %cst_10 {dimension_numbers = #tpu.dot_dimension_numbers<[1], [0], [0], [1], [0, 0, 1, 1], [], []>} : vector<128x32xbf16>, vector<32x48xbf16>, vector<128x48xf32> -> vector<128x48xf32>
    %16 = arith.addf %2, %15 : vector<128x48xf32>
    %c1 = arith.constant 1 : index
    %c0_11 = arith.constant 0 : index
    %c0_12 = arith.constant 0 : index
    %17 = vector.load %arg1[%c1, %c0_11, %c0_12] : memref<5x128x1xi32, #tpu.memory_space<vmem>>, vector<1x128x1xi32>
    %18 = vector.shape_cast %17 : vector<1x128x1xi32> to vector<128x1xi32>
    %19 = vector.broadcast %18 : vector<128x1xi32> to vector<128x128xi32>
    %20 = arith.cmpi eq, %1, %19 : vector<128x128xi32>
    %cst_13 = arith.constant 1.000000e+00 : f32
    %cst_14 = arith.constant 0.000000e+00 : f32
    %21 = vector.broadcast %cst_13 : f32 to vector<128x128xf32>
    %22 = vector.broadcast %cst_14 : f32 to vector<128x128xf32>
    %23 = arith.select %20, %21, %22 : vector<128x128xi1>, vector<128x128xf32>
    %24 = arith.truncf %23 : vector<128x128xf32> to vector<128x128xbf16>
    %cst_15 = arith.constant dense<0.000000e+00> : vector<128x32xf32>
    %25 = tpu.matmul %24, %0, %cst_15 {dimension_numbers = #tpu.dot_dimension_numbers<[1], [0], [0], [1], [0, 0, 1, 1], [], []>} : vector<128x128xbf16>, vector<128x32xbf16>, vector<128x32xf32> -> vector<128x32xf32>
    %26 = arith.truncf %25 : vector<128x32xf32> to vector<128x32xbf16>
    %c1_16 = arith.constant 1 : index
    %c0_17 = arith.constant 0 : index
    %c0_18 = arith.constant 0 : index
    %27 = vector.load %arg3[%c1_16, %c0_17, %c0_18] : memref<5x32x48xbf16, #tpu.memory_space<vmem>>, vector<1x32x48xbf16>
    %28 = vector.shape_cast %27 : vector<1x32x48xbf16> to vector<32x48xbf16>
    %cst_19 = arith.constant dense<0.000000e+00> : vector<128x48xf32>
    %29 = tpu.matmul %26, %28, %cst_19 {dimension_numbers = #tpu.dot_dimension_numbers<[1], [0], [0], [1], [0, 0, 1, 1], [], []>} : vector<128x32xbf16>, vector<32x48xbf16>, vector<128x48xf32> -> vector<128x48xf32>
    %30 = arith.addf %16, %29 : vector<128x48xf32>
    %c2 = arith.constant 2 : index
    %c0_20 = arith.constant 0 : index
    %c0_21 = arith.constant 0 : index
    %31 = vector.load %arg1[%c2, %c0_20, %c0_21] : memref<5x128x1xi32, #tpu.memory_space<vmem>>, vector<1x128x1xi32>
    %32 = vector.shape_cast %31 : vector<1x128x1xi32> to vector<128x1xi32>
    %33 = vector.broadcast %32 : vector<128x1xi32> to vector<128x128xi32>
    %34 = arith.cmpi eq, %1, %33 : vector<128x128xi32>
    %cst_22 = arith.constant 1.000000e+00 : f32
    %cst_23 = arith.constant 0.000000e+00 : f32
    %35 = vector.broadcast %cst_22 : f32 to vector<128x128xf32>
    %36 = vector.broadcast %cst_23 : f32 to vector<128x128xf32>
    %37 = arith.select %34, %35, %36 : vector<128x128xi1>, vector<128x128xf32>
    %38 = arith.truncf %37 : vector<128x128xf32> to vector<128x128xbf16>
    %cst_24 = arith.constant dense<0.000000e+00> : vector<128x32xf32>
    %39 = tpu.matmul %38, %0, %cst_24 {dimension_numbers = #tpu.dot_dimension_numbers<[1], [0], [0], [1], [0, 0, 1, 1], [], []>} : vector<128x128xbf16>, vector<128x32xbf16>, vector<128x32xf32> -> vector<128x32xf32>
    %40 = arith.truncf %39 : vector<128x32xf32> to vector<128x32xbf16>
    %c2_25 = arith.constant 2 : index
    %c0_26 = arith.constant 0 : index
    %c0_27 = arith.constant 0 : index
    %41 = vector.load %arg3[%c2_25, %c0_26, %c0_27] : memref<5x32x48xbf16, #tpu.memory_space<vmem>>, vector<1x32x48xbf16>
    %42 = vector.shape_cast %41 : vector<1x32x48xbf16> to vector<32x48xbf16>
    %cst_28 = arith.constant dense<0.000000e+00> : vector<128x48xf32>
    %43 = tpu.matmul %40, %42, %cst_28 {dimension_numbers = #tpu.dot_dimension_numbers<[1], [0], [0], [1], [0, 0, 1, 1], [], []>} : vector<128x32xbf16>, vector<32x48xbf16>, vector<128x48xf32> -> vector<128x48xf32>
    %44 = arith.addf %30, %43 : vector<128x48xf32>
    %c3 = arith.constant 3 : index
    %c0_29 = arith.constant 0 : index
    %c0_30 = arith.constant 0 : index
    %45 = vector.load %arg1[%c3, %c0_29, %c0_30] : memref<5x128x1xi32, #tpu.memory_space<vmem>>, vector<1x128x1xi32>
    %46 = vector.shape_cast %45 : vector<1x128x1xi32> to vector<128x1xi32>
    %47 = vector.broadcast %46 : vector<128x1xi32> to vector<128x128xi32>
    %48 = arith.cmpi eq, %1, %47 : vector<128x128xi32>
    %cst_31 = arith.constant 1.000000e+00 : f32
    %cst_32 = arith.constant 0.000000e+00 : f32
    %49 = vector.broadcast %cst_31 : f32 to vector<128x128xf32>
    %50 = vector.broadcast %cst_32 : f32 to vector<128x128xf32>
    %51 = arith.select %48, %49, %50 : vector<128x128xi1>, vector<128x128xf32>
    %52 = arith.truncf %51 : vector<128x128xf32> to vector<128x128xbf16>
    %cst_33 = arith.constant dense<0.000000e+00> : vector<128x32xf32>
    %53 = tpu.matmul %52, %0, %cst_33 {dimension_numbers = #tpu.dot_dimension_numbers<[1], [0], [0], [1], [0, 0, 1, 1], [], []>} : vector<128x128xbf16>, vector<128x32xbf16>, vector<128x32xf32> -> vector<128x32xf32>
    %54 = arith.truncf %53 : vector<128x32xf32> to vector<128x32xbf16>
    %c3_34 = arith.constant 3 : index
    %c0_35 = arith.constant 0 : index
    %c0_36 = arith.constant 0 : index
    %55 = vector.load %arg3[%c3_34, %c0_35, %c0_36] : memref<5x32x48xbf16, #tpu.memory_space<vmem>>, vector<1x32x48xbf16>
    %56 = vector.shape_cast %55 : vector<1x32x48xbf16> to vector<32x48xbf16>
    %cst_37 = arith.constant dense<0.000000e+00> : vector<128x48xf32>
    %57 = tpu.matmul %54, %56, %cst_37 {dimension_numbers = #tpu.dot_dimension_numbers<[1], [0], [0], [1], [0, 0, 1, 1], [], []>} : vector<128x32xbf16>, vector<32x48xbf16>, vector<128x48xf32> -> vector<128x48xf32>
    %58 = arith.addf %44, %57 : vector<128x48xf32>
    %c4 = arith.constant 4 : index
    %c0_38 = arith.constant 0 : index
    %c0_39 = arith.constant 0 : index
    %59 = vector.load %arg1[%c4, %c0_38, %c0_39] : memref<5x128x1xi32, #tpu.memory_space<vmem>>, vector<1x128x1xi32>
    %60 = vector.shape_cast %59 : vector<1x128x1xi32> to vector<128x1xi32>
    %61 = vector.broadcast %60 : vector<128x1xi32> to vector<128x128xi32>
    %62 = arith.cmpi eq, %1, %61 : vector<128x128xi32>
    %cst_40 = arith.constant 1.000000e+00 : f32
    %cst_41 = arith.constant 0.000000e+00 : f32
    %63 = vector.broadcast %cst_40 : f32 to vector<128x128xf32>
    %64 = vector.broadcast %cst_41 : f32 to vector<128x128xf32>
    %65 = arith.select %62, %63, %64 : vector<128x128xi1>, vector<128x128xf32>
    %66 = arith.truncf %65 : vector<128x128xf32> to vector<128x128xbf16>
    %cst_42 = arith.constant dense<0.000000e+00> : vector<128x32xf32>
    %67 = tpu.matmul %66, %0, %cst_42 {dimension_numbers = #tpu.dot_dimension_numbers<[1], [0], [0], [1], [0, 0, 1, 1], [], []>} : vector<128x128xbf16>, vector<128x32xbf16>, vector<128x32xf32> -> vector<128x32xf32>
    %68 = arith.truncf %67 : vector<128x32xf32> to vector<128x32xbf16>
    %c4_43 = arith.constant 4 : index
    %c0_44 = arith.constant 0 : index
    %c0_45 = arith.constant 0 : index
    %69 = vector.load %arg3[%c4_43, %c0_44, %c0_45] : memref<5x32x48xbf16, #tpu.memory_space<vmem>>, vector<1x32x48xbf16>
    %70 = vector.shape_cast %69 : vector<1x32x48xbf16> to vector<32x48xbf16>
    %cst_46 = arith.constant dense<0.000000e+00> : vector<128x48xf32>
    %71 = tpu.matmul %68, %70, %cst_46 {dimension_numbers = #tpu.dot_dimension_numbers<[1], [0], [0], [1], [0, 0, 1, 1], [], []>} : vector<128x32xbf16>, vector<32x48xbf16>, vector<128x48xf32> -> vector<128x48xf32>
    %72 = arith.addf %58, %71 : vector<128x48xf32>
    %c0_47 = arith.constant 0 : index
    %c0_48 = arith.constant 0 : index
    %73 = vector.load %arg4[%c0_47, %c0_48] : memref<1x48xf32, #tpu.memory_space<vmem>>, vector<1x48xf32>
    %74 = vector.broadcast %73 : vector<1x48xf32> to vector<128x48xf32>
    %75 = arith.addf %72, %74 : vector<128x48xf32>
    %cst_49 = arith.constant 0.000000e+00 : f32
    %76 = vector.broadcast %cst_49 : f32 to vector<128x48xf32>
    %77 = arith.maximumf %75, %76 : vector<128x48xf32>
    %78 = tpu.iota {dimensions = array<i32: 0>} : vector<16x48xi32>
    %79 = tpu.iota {dimensions = array<i32: 1>} : vector<16x48xi32>
    %c0_i32 = arith.constant 0 : i32
    %80 = vector.broadcast %c0_i32 : i32 to vector<16x48xi32>
    %81 = arith.cmpi sge, %79, %80 : vector<16x48xi32>
    %c16_i32 = arith.constant 16 : i32
    %82 = vector.broadcast %c16_i32 : i32 to vector<16x48xi32>
    %83 = arith.cmpi slt, %79, %82 : vector<16x48xi32>
    %84 = arith.andi %81, %83 : vector<16x48xi1>
    %c14_i32 = arith.constant 14 : i32
    %85 = vector.broadcast %c14_i32 : i32 to vector<16x48xi32>
    %86 = arith.cmpi slt, %78, %85 : vector<16x48xi32>
    %87 = arith.andi %84, %86 : vector<16x48xi1>
    %c16_i32_50 = arith.constant 16 : i32
    %88 = vector.broadcast %c16_i32_50 : i32 to vector<16x48xi32>
    %89 = arith.cmpi sge, %79, %88 : vector<16x48xi32>
    %c32_i32 = arith.constant 32 : i32
    %90 = vector.broadcast %c32_i32 : i32 to vector<16x48xi32>
    %91 = arith.cmpi slt, %79, %90 : vector<16x48xi32>
    %92 = arith.andi %89, %91 : vector<16x48xi1>
    %c13_i32 = arith.constant 13 : i32
    %93 = vector.broadcast %c13_i32 : i32 to vector<16x48xi32>
    %94 = arith.cmpi slt, %78, %93 : vector<16x48xi32>
    %95 = arith.andi %92, %94 : vector<16x48xi1>
    %96 = arith.ori %87, %95 : vector<16x48xi1>
    %c32_i32_51 = arith.constant 32 : i32
    %97 = vector.broadcast %c32_i32_51 : i32 to vector<16x48xi32>
    %98 = arith.cmpi sge, %79, %97 : vector<16x48xi32>
    %c48_i32 = arith.constant 48 : i32
    %99 = vector.broadcast %c48_i32 : i32 to vector<16x48xi32>
    %100 = arith.cmpi slt, %79, %99 : vector<16x48xi32>
    %101 = arith.andi %98, %100 : vector<16x48xi1>
    %c12_i32 = arith.constant 12 : i32
    %102 = vector.broadcast %c12_i32 : i32 to vector<16x48xi32>
    %103 = arith.cmpi slt, %78, %102 : vector<16x48xi32>
    %104 = arith.andi %101, %103 : vector<16x48xi1>
    %105 = arith.ori %96, %104 : vector<16x48xi1>
    %cst_52 = arith.constant 1.000000e+00 : f32
    %cst_53 = arith.constant 0.000000e+00 : f32
    %106 = vector.broadcast %cst_52 : f32 to vector<16x48xf32>
    %107 = vector.broadcast %cst_53 : f32 to vector<16x48xf32>
    %108 = arith.select %105, %106, %107 : vector<16x48xi1>, vector<16x48xf32>
    %109 = vector.shape_cast %77 : vector<128x48xf32> to vector<8x16x48xf32>
    %110 = vector.shape_cast %108 : vector<16x48xf32> to vector<1x16x48xf32>
    %111 = vector.broadcast %110 : vector<1x16x48xf32> to vector<8x16x48xf32>
    %112 = arith.mulf %109, %111 : vector<8x16x48xf32>
    %cst_54 = arith.constant dense<0xFF800000> : vector<8x48xf32>
    %113 = vector.multi_reduction <maximumf>, %112, %cst_54 [1] : vector<8x16x48xf32> to vector<8x48xf32>
    %114 = arith.truncf %113 : vector<8x48xf32> to vector<8x48xbf16>
    %c0_55 = arith.constant 0 : index
    %c0_56 = arith.constant 0 : index
    %115 = vector.load %arg5[%c0_55, %c0_56] : memref<48x128xbf16, #tpu.memory_space<vmem>>, vector<48x128xbf16>
    %cst_57 = arith.constant dense<0.000000e+00> : vector<8x128xf32>
    %116 = tpu.matmul %114, %115, %cst_57 {dimension_numbers = #tpu.dot_dimension_numbers<[1], [0], [0], [1], [0, 0, 1, 1], [], []>} : vector<8x48xbf16>, vector<48x128xbf16>, vector<8x128xf32> -> vector<8x128xf32>
    %c0_58 = arith.constant 0 : index
    %c0_59 = arith.constant 0 : index
    %117 = vector.load %arg6[%c0_58, %c0_59] : memref<1x128xf32, #tpu.memory_space<vmem>>, vector<1x128xf32>
    %118 = vector.broadcast %117 : vector<1x128xf32> to vector<8x128xf32>
    %119 = arith.addf %116, %118 : vector<8x128xf32>
    %c0_60 = arith.constant 0 : index
    %c0_61 = arith.constant 0 : index
    %120 = vector.load %arg7[%c0_60, %c0_61] : memref<8x128xf32, #tpu.memory_space<vmem>>, vector<8x128xf32>
    tpu.vector_store %arg7[%c0_60, %c0_61], %119 {strides = array<i32>} : memref<8x128xf32, #tpu.memory_space<vmem>>, vector<8x128xf32>,
    return
  }
  func.func @transform_0(%arg0: i32) -> (i32, i32, i32) {
    %c0_i32 = arith.constant 0 : i32
    %c0_i32_0 = arith.constant 0 : i32
    %c0_i32_1 = arith.constant 0 : i32
    return %c0_i32, %arg0, %c0_i32_0 : i32, i32, i32
  }
  func.func @transform_1(%arg0: i32) -> (i32, i32) {
    %c0_i32 = arith.constant 0 : i32
    %c0_i32_0 = arith.constant 0 : i32
    %c0_i32_1 = arith.constant 0 : i32
    return %c0_i32, %c0_i32_0 : i32, i32
  }
  func.func @transform_2(%arg0: i32) -> (i32, i32, i32) {
    %c0_i32 = arith.constant 0 : i32
    %c0_i32_0 = arith.constant 0 : i32
    %c0_i32_1 = arith.constant 0 : i32
    %c0_i32_2 = arith.constant 0 : i32
    return %c0_i32, %c0_i32_0, %c0_i32_1 : i32, i32, i32
  }
  func.func @transform_3(%arg0: i32) -> (i32, i32) {
    %c0_i32 = arith.constant 0 : i32
    %c0_i32_0 = arith.constant 0 : i32
    %c0_i32_1 = arith.constant 0 : i32
    return %c0_i32, %c0_i32_0 : i32, i32
  }
  func.func @transform_4(%arg0: i32) -> (i32, i32) {
    %c0_i32 = arith.constant 0 : i32
    %c0_i32_0 = arith.constant 0 : i32
    %c0_i32_1 = arith.constant 0 : i32
    return %c0_i32, %c0_i32_0 : i32, i32
  }
  func.func @transform_5(%arg0: i32) -> (i32, i32) {
    %c0_i32 = arith.constant 0 : i32
    %c0_i32_0 = arith.constant 0 : i32
    %c0_i32_1 = arith.constant 0 : i32
    return %c0_i32, %c0_i32_0 : i32, i32
  }
  func.func @transform_6(%arg0: i32) -> (i32, i32) {
    %c0_i32 = arith.constant 0 : i32
    %c0_i32_0 = arith.constant 0 : i32
    return %arg0, %c0_i32 : i32, i32
  }
}

</mosaic_0001>

<llo_original>
// kernel: tpu_custom_call.1
$region0: #{tpu_custom_call.1}
  #allocation0 [shape = 'u32[]', space=smem, size = 0x4, offset = 0x4, fixed_abs, tag = 'smem constant byte address 0x4 - core index']
  #allocation1 [shape = 'u32[144,128]{1,0:T(1,128)}', space=vmem, size = 0x12000, scoped, tag = 'internal scratch']
  %s0 = inlined_call_operand.vmem [shape: s32[5,128,1], index: 0, kind: input, shape index: {}]
  %s1 = inlined_call_operand.vmem [shape: bf16[128,32], index: 1, kind: input, shape index: {}]
  %s2 = inlined_call_operand.vmem [shape: bf16[5,32,48], index: 2, kind: input, shape index: {}]
  %s3 = inlined_call_operand.vmem [shape: f32[1,48], index: 3, kind: input, shape index: {}]
  %s4 = inlined_call_operand.vmem [shape: bf16[48,128], index: 4, kind: input, shape index: {}]
  %s5 = inlined_call_operand.vmem [shape: f32[1,128], index: 5, kind: input, shape index: {}]
  %s6 = inlined_call_operand.hbm [shape: f32[8,128], index: 6, kind: output, shape index: {}]
  %s7 = sld [smem:[#allocation0]]
  $region34: #{tpu_custom_call.1} parent=0
    _
  %s9 = ssub.s32 1, %s7
  %s10 = scalar_select 0, %s9, %s7
  $region1: #{tpu_custom_call.1} parent=0
    #allocation2 [shape = 'u8[4096]{0}', space=vmem, size = 0x1000, scoped, tag = 'output window, operand 0, single buffered']
    #allocation3 [shape = 's32[1]{0}', space=sflag, size = 0x4, scoped, tag = 'scoped memory for tpu_custom_call.1']
    %11 = vsyncpa [#allocation3], 0
    // Predicated region
    $region2: #{tpu_custom_call.1} parent=1 // pred_check
      _
    $region3: #{tpu_custom_call.1} parent=1 // pred_check_branch
      %13 = sbr.rel (0) target = $region5
    $region4: #{tpu_custom_call.1} parent=1 // pred_region
      _
    $region5: #{tpu_custom_call.1} parent=1 // pred_fallthru
      _
    // Predicated region
    $region6: #{tpu_custom_call.1} parent=1 // pred_check
      _
    $region7: #{tpu_custom_call.1} parent=1 // pred_check_branch
      %15 = sbr.rel (0) target = $region9
    $region8: #{tpu_custom_call.1} parent=1 // pred_region
      _
    $region9: #{tpu_custom_call.1} parent=1 // pred_fallthru
      _
    // Predicated region
    $region10: #{tpu_custom_call.1} parent=1 // pred_check
      _
    $region11: #{tpu_custom_call.1} parent=1 // pred_check_branch
      %17 = sbr.rel (0) target = $region13
    $region12: #{tpu_custom_call.1} parent=1 // pred_region
      _
    $region13: #{tpu_custom_call.1} parent=1 // pred_fallthru
      _
    // Predicated region
    $region14: #{tpu_custom_call.1} parent=1 // pred_check
      _
    $region15: #{tpu_custom_call.1} parent=1 // pred_check_branch
      %19 = sbr.rel (0) target = $region17
    $region16: #{tpu_custom_call.1} parent=1 // pred_region
      _
    $region17: #{tpu_custom_call.1} parent=1 // pred_fallthru
      _
    // Predicated region
    $region18: #{tpu_custom_call.1} parent=1 // pred_check
      _
    $region19: #{tpu_custom_call.1} parent=1 // pred_check_branch
      %21 = sbr.rel (0) target = $region21
    $region20: #{tpu_custom_call.1} parent=1 // pred_region
      _
    $region21: #{tpu_custom_call.1} parent=1 // pred_fallthru
      _
    // Predicated region
    $region22: #{tpu_custom_call.1} parent=1 // pred_check
      _
    $region23: #{tpu_custom_call.1} parent=1 // pred_check_branch
      %23 = sbr.rel (0) target = $region25
    $region24: #{tpu_custom_call.1} parent=1 // pred_region
      _
    $region25: #{tpu_custom_call.1} parent=1 // pred_fallthru
      _
    %v25 = vld [vmem:[%s1] sm:$0xf]
    %v26 = vld [vmem:[%s1 + $0x4] sm:$0xf]
    %v27 = vld [vmem:[%s1 + $0x8] sm:$0xf]
    %v28 = vld [vmem:[%s1 + $0xc] sm:$0xf]
    %v29 = vld [vmem:[%s1 + $0x10] sm:$0xf]
    %v30 = vld [vmem:[%s1 + $0x14] sm:$0xf]
    %v31 = vld [vmem:[%s1 + $0x18] sm:$0xf]
    %v32 = vld [vmem:[%s1 + $0x1c] sm:$0xf]
    %v33 = vld [vmem:[%s1 + $0x20] sm:$0xf]
    %v34 = vld [vmem:[%s1 + $0x24] sm:$0xf]
    %v35 = vld [vmem:[%s1 + $0x28] sm:$0xf]
    %v36 = vld [vmem:[%s1 + $0x2c] sm:$0xf]
    %v37 = vld [vmem:[%s1 + $0x30] sm:$0xf]
    %v38 = vld [vmem:[%s1 + $0x34] sm:$0xf]
    %v39 = vld [vmem:[%s1 + $0x38] sm:$0xf]
    %v40 = vld [vmem:[%s1 + $0x3c] sm:$0xf]
    %v41 = vlaneseq
    %v42 = vand.u32 %v41, 127
    %v43 = vld [vmem:[%s0] sm:$0xff]
    %v44 = vld [vmem:[%s0 + $0x8] sm:$0xff]
    %v45 = vld [vmem:[%s0 + $0x10] sm:$0xff]
    %v46 = vld [vmem:[%s0 + $0x18] sm:$0xff]
    %v47 = vld [vmem:[%s0 + $0x20] sm:$0xff]
    %v48 = vld [vmem:[%s0 + $0x28] sm:$0xff]
    %v49 = vld [vmem:[%s0 + $0x30] sm:$0xff]
    %v50 = vld [vmem:[%s0 + $0x38] sm:$0xff]
    %v51 = vld [vmem:[%s0 + $0x40] sm:$0xff]
    %v52 = vld [vmem:[%s0 + $0x48] sm:$0xff]
    %v53 = vld [vmem:[%s0 + $0x50] sm:$0xff]
    %v54 = vld [vmem:[%s0 + $0x58] sm:$0xff]
    %v55 = vld [vmem:[%s0 + $0x60] sm:$0xff]
    %v56 = vld [vmem:[%s0 + $0x68] sm:$0xff]
    %v57 = vld [vmem:[%s0 + $0x70] sm:$0xff]
    %v58 = vld [vmem:[%s0 + $0x78] sm:$0xff]
    %59 = vset.pattern.permute.xlu0 0
    %60 = vperm.xlu0 %59, %v43
    %v61 = vpop.permute.xlu0 %60
    %62 = vset.pattern.permute.xlu0 0
    %63 = vperm.xlu0 %62, %v44
    %v64 = vpop.permute.xlu0 %63
    %65 = vset.pattern.permute.xlu0 0
    %66 = vperm.xlu0 %65, %v45
    %v67 = vpop.permute.xlu0 %66
    %68 = vset.pattern.permute.xlu0 0
    %69 = vperm.xlu0 %68, %v46
    %v70 = vpop.permute.xlu0 %69
    %71 = vset.pattern.permute.xlu0 0
    %72 = vperm.xlu0 %71, %v47
    %v73 = vpop.permute.xlu0 %72
    %74 = vset.pattern.permute.xlu0 0
    %75 = vperm.xlu0 %74, %v48
    %v76 = vpop.permute.xlu0 %75
    %77 = vset.pattern.permute.xlu0 0
    %78 = vperm.xlu0 %77, %v49
    %v79 = vpop.permute.xlu0 %78
    %80 = vset.pattern.permute.xlu0 0
    %81 = vperm.xlu0 %80, %v50
    %v82 = vpop.permute.xlu0 %81
    %83 = vset.pattern.permute.xlu0 0
    %84 = vperm.xlu0 %83, %v51
    %v85 = vpop.permute.xlu0 %84
    %86 = vset.pattern.permute.xlu0 0
    %87 = vperm.xlu0 %86, %v52
    %v88 = vpop.permute.xlu0 %87
    %89 = vset.pattern.permute.xlu0 0
    %90 = vperm.xlu0 %89, %v53
    %v91 = vpop.permute.xlu0 %90
    %92 = vset.pattern.permute.xlu0 0
    %93 = vperm.xlu0 %92, %v54
    %v94 = vpop.permute.xlu0 %93
    %95 = vset.pattern.permute.xlu0 0
    %96 = vperm.xlu0 %95, %v55
    %v97 = vpop.permute.xlu0 %96
    %98 = vset.pattern.permute.xlu0 0
    %99 = vperm.xlu0 %98, %v56
    %v100 = vpop.permute.xlu0 %99
    %101 = vset.pattern.permute.xlu0 0
    %102 = vperm.xlu0 %101, %v57
    %v103 = vpop.permute.xlu0 %102
    %104 = vset.pattern.permute.xlu0 0
    %105 = vperm.xlu0 %104, %v58
    %v106 = vpop.permute.xlu0 %105
    %vm107 = vcmp.eq.s32.totalorder %v42, %v61
    %vm108 = vcmp.eq.s32.totalorder %v42, %v64
    %vm109 = vcmp.eq.s32.totalorder %v42, %v67
    %vm110 = vcmp.eq.s32.totalorder %v42, %v70
    %vm111 = vcmp.eq.s32.totalorder %v42, %v73
    %vm112 = vcmp.eq.s32.totalorder %v42, %v76
    %vm113 = vcmp.eq.s32.totalorder %v42, %v79
    %vm114 = vcmp.eq.s32.totalorder %v42, %v82
    %vm115 = vcmp.eq.s32.totalorder %v42, %v85
    %vm116 = vcmp.eq.s32.totalorder %v42, %v88
    %vm117 = vcmp.eq.s32.totalorder %v42, %v91
    %vm118 = vcmp.eq.s32.totalorder %v42, %v94
    %vm119 = vcmp.eq.s32.totalorder %v42, %v97
    %vm120 = vcmp.eq.s32.totalorder %v42, %v100
    %vm121 = vcmp.eq.s32.totalorder %v42, %v103
    %vm122 = vcmp.eq.s32.totalorder %v42, %v106
    %v123 = vsel %vm107, 1.0, 0.0
    %v124 = vsel %vm108, 1.0, 0.0
    %v125 = vsel %vm109, 1.0, 0.0
    %v126 = vsel %vm110, 1.0, 0.0
    %v127 = vsel %vm111, 1.0, 0.0
    %v128 = vsel %vm112, 1.0, 0.0
    %v129 = vsel %vm113, 1.0, 0.0
    %v130 = vsel %vm114, 1.0, 0.0
    %v131 = vsel %vm115, 1.0, 0.0
    %v132 = vsel %vm116, 1.0, 0.0
    %v133 = vsel %vm117, 1.0, 0.0
    %v134 = vsel %vm118, 1.0, 0.0
    %v135 = vsel %vm119, 1.0, 0.0
    %v136 = vsel %vm120, 1.0, 0.0
    %v137 = vsel %vm121, 1.0, 0.0
    %v138 = vsel %vm122, 1.0, 0.0
    %v139 = vpack.c.bf16 %v124, %v123
    %v140 = vpack.c.bf16 %v126, %v125
    %v141 = vpack.c.bf16 %v128, %v127
    %v142 = vpack.c.bf16 %v130, %v129
    %v143 = vpack.c.bf16 %v132, %v131
    %v144 = vpack.c.bf16 %v134, %v133
    %v145 = vpack.c.bf16 %v136, %v135
    %v146 = vpack.c.bf16 %v138, %v137
    %v163 = vunpack.c.l.b16 %v25
    %v164 = vunpack.c.l.b16 %v26
    %v165 = vunpack.c.l.b16 %v27
    %v166 = vunpack.c.l.b16 %v28
    %v167 = vunpack.c.l.b16 %v29
    %v168 = vunpack.c.l.b16 %v30
    %v169 = vunpack.c.l.b16 %v31
    %v170 = vunpack.c.l.b16 %v32
    %v171 = vunpack.c.l.b16 %v33
    %v172 = vunpack.c.l.b16 %v34
    %v173 = vunpack.c.l.b16 %v35
    %v174 = vunpack.c.l.b16 %v36
    %v175 = vunpack.c.l.b16 %v37
    %v176 = vunpack.c.l.b16 %v38
    %v177 = vunpack.c.l.b16 %v39
    %v178 = vunpack.c.l.b16 %v40
    %v179 = vpack.c.b16 %v164, %v163
    %v180 = vpack.c.b16 %v166, %v165
    %v181 = vpack.c.b16 %v168, %v167
    %v182 = vpack.c.b16 %v170, %v169
    %v183 = vpack.c.b16 %v172, %v171
    %v184 = vpack.c.b16 %v174, %v173
    %v185 = vpack.c.b16 %v176, %v175
    %v186 = vpack.c.b16 %v178, %v177
    %195 = vmatprep.subr.bf16.mxu0 0
    %196 = vmatpush1.bf16.msra.mxu0 %v179
    %197 = vmatprep.subr.bf16.mxu0 0
    %198 = vmatpush1.bf16.msra.mxu0 %v180
    %199 = vmatprep.subr.bf16.mxu0 0
    %200 = vmatpush1.bf16.msra.mxu0 %v181
    %201 = vmatprep.subr.bf16.mxu0 0
    %202 = vmatpush1.bf16.msra.mxu0 %v182
    %203 = vmatprep.subr.bf16.mxu0 0
    %204 = vmatpush1.bf16.msra.mxu0 %v183
    %205 = vmatprep.subr.bf16.mxu0 0
    %206 = vmatpush1.bf16.msra.mxu0 %v184
    %207 = vmatprep.subr.bf16.mxu0 0
    %208 = vmatpush1.bf16.msra.mxu0 %v185
    %209 = vmatprep.subr.bf16.mxu0 0
    %210 = vmatpush1.bf16.msra.mxu0 %v186
    %211 = vmatprep.subr.bf16.mxu0 0
    %212 = vmatpush1.bf16.msra.mxu0 0
    %213 = vmatprep.subr.bf16.mxu0 0
    %214 = vmatpush1.bf16.msra.mxu0 0
    %215 = vmatprep.subr.bf16.mxu0 0
    %216 = vmatpush1.bf16.msra.mxu0 0
    %217 = vmatprep.subr.bf16.mxu0 0
    %218 = vmatpush1.bf16.msra.mxu0 0
    %219 = vmatprep.subr.bf16.mxu0 0
    %220 = vmatpush1.bf16.msra.mxu0 0
    %221 = vmatprep.subr.bf16.mxu0 0
    %222 = vmatpush1.bf16.msra.mxu0 0
    %223 = vmatprep.subr.bf16.mxu0 0
    %224 = vmatpush1.bf16.msra.mxu0 0
    %225 = vmatprep.subr.bf16.mxu0 0
    %226 = vmatpush1.bf16.msra.mxu0 0
    %227 = vmatprep.mubr.bf16.mxu0 0
    %228 = vmatmul.mubr.bf16.gmra.mrb[0].mxu0 %v139
    %v229 = vpop.f32.mrb[0].mxu0
    %v230 = vadd.f32 0.0, %v229
    %v231 = vpop.f32.mrb[0].mxu0
    %v232 = vpop.f32.mrb[0].mxu0
    %v233 = vadd.f32 0.0, %v232
    %v234 = vpop.f32.mrb[0].mxu0
    %235 = vmatprep.mubr.bf16.mxu0 0
    %236 = vmatmul.mubr.bf16.gmra.mrb[0].mxu0 %v140
    %v237 = vpop.f32.mrb[0].mxu0
    %v238 = vadd.f32 0.0, %v237
    %v239 = vpop.f32.mrb[0].mxu0
    %v240 = vpop.f32.mrb[0].mxu0
    %v241 = vadd.f32 0.0, %v240
    %v242 = vpop.f32.mrb[0].mxu0
    %243 = vmatprep.mubr.bf16.mxu0 0
    %244 = vmatmul.mubr.bf16.gmra.mrb[0].mxu0 %v141
    %v245 = vpop.f32.mrb[0].mxu0
    %v246 = vadd.f32 0.0, %v245
    %v247 = vpop.f32.mrb[0].mxu0
    %v248 = vpop.f32.mrb[0].mxu0
    %v249 = vadd.f32 0.0, %v248
    %v250 = vpop.f32.mrb[0].mxu0
    %251 = vmatprep.mubr.bf16.mxu0 0
    %252 = vmatmul.mubr.bf16.gmra.mrb[0].mxu0 %v142
    %v253 = vpop.f32.mrb[0].mxu0
    %v254 = vadd.f32 0.0, %v253
    %v255 = vpop.f32.mrb[0].mxu0
    %v256 = vpop.f32.mrb[0].mxu0
    %v257 = vadd.f32 0.0, %v256
    %v258 = vpop.f32.mrb[0].mxu0
    %259 = vmatprep.mubr.bf16.mxu0 0
    %260 = vmatmul.mubr.bf16.gmra.mrb[0].mxu0 %v143
    %v261 = vpop.f32.mrb[0].mxu0
    %v262 = vadd.f32 0.0, %v261
    %v263 = vpop.f32.mrb[0].mxu0
    %v264 = vpop.f32.mrb[0].mxu0
    %v265 = vadd.f32 0.0, %v264
    %v266 = vpop.f32.mrb[0].mxu0
    %267 = vmatprep.mubr.bf16.mxu0 0
    %268 = vmatmul.mubr.bf16.gmra.mrb[0].mxu0 %v144
    %v269 = vpop.f32.mrb[0].mxu0
    %v270 = vadd.f32 0.0, %v269
    %v271 = vpop.f32.mrb[0].mxu0
    %v272 = vpop.f32.mrb[0].mxu0
    %v273 = vadd.f32 0.0, %v272
    %v274 = vpop.f32.mrb[0].mxu0
    %275 = vmatprep.mubr.bf16.mxu0 0
    %276 = vmatmul.mubr.bf16.gmra.mrb[0].mxu0 %v145
    %v277 = vpop.f32.mrb[0].mxu0
    %v278 = vadd.f32 0.0, %v277
    %v279 = vpop.f32.mrb[0].mxu0
    %v280 = vpop.f32.mrb[0].mxu0
    %v281 = vadd.f32 0.0, %v280
    %v282 = vpop.f32.mrb[0].mxu0
    %283 = vmatprep.mubr.bf16.mxu0 0
    %284 = vmatmul.mubr.bf16.gmra.mrb[0].mxu0 %v146
    %v285 = vpop.f32.mrb[0].mxu0
    %v286 = vadd.f32 0.0, %v285
    %v287 = vpop.f32.mrb[0].mxu0
    %v288 = vpop.f32.mrb[0].mxu0
    %v289 = vadd.f32 0.0, %v288
    %v290 = vpop.f32.mrb[0].mxu0
    %291 = vdwg.mxu0
    %v292 = vpack.c.bf16 %v233, %v230
    %v293 = vpack.c.bf16 %v241, %v238
    %v294 = vpack.c.bf16 %v249, %v246
    %v295 = vpack.c.bf16 %v257, %v254
    %v296 = vpack.c.bf16 %v265, %v262
    %v297 = vpack.c.bf16 %v273, %v270
    %v298 = vpack.c.bf16 %v281, %v278
    %v299 = vpack.c.bf16 %v289, %v286
    %v300 = vld [vmem:[%s2] sm:$0xf]
    %v301 = vld [vmem:[%s2 + $0x4] sm:$0xf]
    %v302 = vld [vmem:[%s2 + $0x8] sm:$0xf]
    %v303 = vld [vmem:[%s2 + $0xc] sm:$0xf]
    %s304 = scalar_lea.vmem %s0, 128
    %v305 = vld [vmem:[%s304] sm:$0xff]
    %v306 = vld [vmem:[%s304 + $0x8] sm:$0xff]
    %v307 = vld [vmem:[%s304 + $0x10] sm:$0xff]
    %v308 = vld [vmem:[%s304 + $0x18] sm:$0xff]
    %v309 = vld [vmem:[%s304 + $0x20] sm:$0xff]
    %v310 = vld [vmem:[%s304 + $0x28] sm:$0xff]
    %v311 = vld [vmem:[%s304 + $0x30] sm:$0xff]
    %v312 = vld [vmem:[%s304 + $0x38] sm:$0xff]
    %v313 = vld [vmem:[%s304 + $0x40] sm:$0xff]
    %v314 = vld [vmem:[%s304 + $0x48] sm:$0xff]
    %v315 = vld [vmem:[%s304 + $0x50] sm:$0xff]
    %v316 = vld [vmem:[%s304 + $0x58] sm:$0xff]
    %v317 = vld [vmem:[%s304 + $0x60] sm:$0xff]
    %v318 = vld [vmem:[%s304 + $0x68] sm:$0xff]
    %v319 = vld [vmem:[%s304 + $0x70] sm:$0xff]
    %v320 = vld [vmem:[%s304 + $0x78] sm:$0xff]
    %321 = vset.pattern.permute.xlu0 0
    %322 = vperm.xlu0 %321, %v305
    %v323 = vpop.permute.xlu0 %322
    %324 = vset.pattern.permute.xlu0 0
    %325 = vperm.xlu0 %324, %v306
    %v326 = vpop.permute.xlu0 %325
    %327 = vset.pattern.permute.xlu0 0
    %328 = vperm.xlu0 %327, %v307
    %v329 = vpop.permute.xlu0 %328
    %330 = vset.pattern.permute.xlu0 0
    %331 = vperm.xlu0 %330, %v308
    %v332 = vpop.permute.xlu0 %331
    %333 = vset.pattern.permute.xlu0 0
    %334 = vperm.xlu0 %333, %v309
    %v335 = vpop.permute.xlu0 %334
    %336 = vset.pattern.permute.xlu0 0
    %337 = vperm.xlu0 %336, %v310
    %v338 = vpop.permute.xlu0 %337
    %339 = vset.pattern.permute.xlu0 0
    %340 = vperm.xlu0 %339, %v311
    %v341 = vpop.permute.xlu0 %340
    %342 = vset.pattern.permute.xlu0 0
    %343 = vperm.xlu0 %342, %v312
    %v344 = vpop.permute.xlu0 %343
    %345 = vset.pattern.permute.xlu0 0
    %346 = vperm.xlu0 %345, %v313
    %v347 = vpop.permute.xlu0 %346
    %348 = vset.pattern.permute.xlu0 0
    %349 = vperm.xlu0 %348, %v314
    %v350 = vpop.permute.xlu0 %349
    %351 = vset.pattern.permute.xlu0 0
    %352 = vperm.xlu0 %351, %v315
    %v353 = vpop.permute.xlu0 %352
    %354 = vset.pattern.permute.xlu0 0
    %355 = vperm.xlu0 %354, %v316
    %v356 = vpop.permute.xlu0 %355
    %357 = vset.pattern.permute.xlu0 0
    %358 = vperm.xlu0 %357, %v317
    %v359 = vpop.permute.xlu0 %358
    %360 = vset.pattern.permute.xlu0 0
    %361 = vperm.xlu0 %360, %v318
    %v362 = vpop.permute.xlu0 %361
    %363 = vset.pattern.permute.xlu0 0
    %364 = vperm.xlu0 %363, %v319
    %v365 = vpop.permute.xlu0 %364
    %366 = vset.pattern.permute.xlu0 0
    %367 = vperm.xlu0 %366, %v320
    %v368 = vpop.permute.xlu0 %367
    %vm369 = vcmp.eq.s32.totalorder %v42, %v323
    %vm370 = vcmp.eq.s32.totalorder %v42, %v326
    %vm371 = vcmp.eq.s32.totalorder %v42, %v329
    %vm372 = vcmp.eq.s32.totalorder %v42, %v332
    %vm373 = vcmp.eq.s32.totalorder %v42, %v335
    %vm374 = vcmp.eq.s32.totalorder %v42, %v338
    %vm375 = vcmp.eq.s32.totalorder %v42, %v341
    %vm376 = vcmp.eq.s32.totalorder %v42, %v344
    %vm377 = vcmp.eq.s32.totalorder %v42, %v347
    %vm378 = vcmp.eq.s32.totalorder %v42, %v350
    %vm379 = vcmp.eq.s32.totalorder %v42, %v353
    %vm380 = vcmp.eq.s32.totalorder %v42, %v356
    %vm381 = vcmp.eq.s32.totalorder %v42, %v359
    %vm382 = vcmp.eq.s32.totalorder %v42, %v362
    %vm383 = vcmp.eq.s32.totalorder %v42, %v365
    %vm384 = vcmp.eq.s32.totalorder %v42, %v368
    %v385 = vsel %vm369, 1.0, 0.0
    %v386 = vsel %vm370, 1.0, 0.0
    %v387 = vsel %vm371, 1.0, 0.0
    %v388 = vsel %vm372, 1.0, 0.0
    %v389 = vsel %vm373, 1.0, 0.0
    %v390 = vsel %vm374, 1.0, 0.0
    %v391 = vsel %vm375, 1.0, 0.0
    %v392 = vsel %vm376, 1.0, 0.0
    %v393 = vsel %vm377, 1.0, 0.0
    %v394 = vsel %vm378, 1.0, 0.0
    %v395 = vsel %vm379, 1.0, 0.0
    %v396 = vsel %vm380, 1.0, 0.0
    %v397 = vsel %vm381, 1.0, 0.0
    %v398 = vsel %vm382, 1.0, 0.0
    %v399 = vsel %vm383, 1.0, 0.0
    %v400 = vsel %vm384, 1.0, 0.0
    %v401 = vpack.c.bf16 %v386, %v385
    %v402 = vpack.c.bf16 %v388, %v387
    %v403 = vpack.c.bf16 %v390, %v389
    %v404 = vpack.c.bf16 %v392, %v391
    %v405 = vpack.c.bf16 %v394, %v393
    %v406 = vpack.c.bf16 %v396, %v395
    %v407 = vpack.c.bf16 %v398, %v397
    %v408 = vpack.c.bf16 %v400, %v399
    %409 = vmatprep.subr.bf16.mxu0 0
    %410 = vmatpush1.bf16.msra.mxu0 %v179
    %411 = vmatprep.subr.bf16.mxu0 0
    %412 = vmatpush1.bf16.msra.mxu0 %v180
    %413 = vmatprep.subr.bf16.mxu0 0
    %414 = vmatpush1.bf16.msra.mxu0 %v181
    %415 = vmatprep.subr.bf16.mxu0 0
    %416 = vmatpush1.bf16.msra.mxu0 %v182
    %417 = vmatprep.subr.bf16.mxu0 0
    %418 = vmatpush1.bf16.msra.mxu0 %v183
    %419 = vmatprep.subr.bf16.mxu0 0
    %420 = vmatpush1.bf16.msra.mxu0 %v184
    %421 = vmatprep.subr.bf16.mxu0 0
    %422 = vmatpush1.bf16.msra.mxu0 %v185
    %423 = vmatprep.subr.bf16.mxu0 0
    %424 = vmatpush1.bf16.msra.mxu0 %v186
    %425 = vmatprep.subr.bf16.mxu0 0
    %426 = vmatpush1.bf16.msra.mxu0 0
    %427 = vmatprep.subr.bf16.mxu0 0
    %428 = vmatpush1.bf16.msra.mxu0 0
    %429 = vmatprep.subr.bf16.mxu0 0
    %430 = vmatpush1.bf16.msra.mxu0 0
    %431 = vmatprep.subr.bf16.mxu0 0
    %432 = vmatpush1.bf16.msra.mxu0 0
    %433 = vmatprep.subr.bf16.mxu0 0
    %434 = vmatpush1.bf16.msra.mxu0 0
    %435 = vmatprep.subr.bf16.mxu0 0
    %436 = vmatpush1.bf16.msra.mxu0 0
    %437 = vmatprep.subr.bf16.mxu0 0
    %438 = vmatpush1.bf16.msra.mxu0 0
    %439 = vmatprep.subr.bf16.mxu0 0
    %440 = vmatpush1.bf16.msra.mxu0 0
    %441 = vmatprep.mubr.bf16.mxu0 0
    %442 = vmatmul.mubr.bf16.gmra.mrb[0].mxu0 %v401
    %v443 = vpop.f32.mrb[0].mxu0
    %v444 = vadd.f32 0.0, %v443
    %v445 = vpop.f32.mrb[0].mxu0
    %v446 = vpop.f32.mrb[0].mxu0
    %v447 = vadd.f32 0.0, %v446
    %v448 = vpop.f32.mrb[0].mxu0
    %449 = vmatprep.mubr.bf16.mxu0 0
    %450 = vmatmul.mubr.bf16.gmra.mrb[0].mxu0 %v402
    %v451 = vpop.f32.mrb[0].mxu0
    %v452 = vadd.f32 0.0, %v451
    %v453 = vpop.f32.mrb[0].mxu0
    %v454 = vpop.f32.mrb[0].mxu0
    %v455 = vadd.f32 0.0, %v454
    %v456 = vpop.f32.mrb[0].mxu0
    %457 = vmatprep.mubr.bf16.mxu0 0
    %458 = vmatmul.mubr.bf16.gmra.mrb[0].mxu0 %v403
    %v459 = vpop.f32.mrb[0].mxu0
    %v460 = vadd.f32 0.0, %v459
    %v461 = vpop.f32.mrb[0].mxu0
    %v462 = vpop.f32.mrb[0].mxu0
    %v463 = vadd.f32 0.0, %v462
    %v464 = vpop.f32.mrb[0].mxu0
    %465 = vmatprep.mubr.bf16.mxu0 0
    %466 = vmatmul.mubr.bf16.gmra.mrb[0].mxu0 %v404
    %v467 = vpop.f32.mrb[0].mxu0
    %v468 = vadd.f32 0.0, %v467
    %v469 = vpop.f32.mrb[0].mxu0
    %v470 = vpop.f32.mrb[0].mxu0
    %v471 = vadd.f32 0.0, %v470
    %v472 = vpop.f32.mrb[0].mxu0
    %473 = vmatprep.mubr.bf16.mxu0 0
    %474 = vmatmul.mubr.bf16.gmra.mrb[0].mxu0 %v405
    %v475 = vpop.f32.mrb[0].mxu0
    %v476 = vadd.f32 0.0, %v475
    %v477 = vpop.f32.mrb[0].mxu0
    %v478 = vpop.f32.mrb[0].mxu0
    %v479 = vadd.f32 0.0, %v478
    %v480 = vpop.f32.mrb[0].mxu0
    %481 = vmatprep.mubr.bf16.mxu0 0
    %482 = vmatmul.mubr.bf16.gmra.mrb[0].mxu0 %v406
    %v483 = vpop.f32.mrb[0].mxu0
    %v484 = vadd.f32 0.0, %v483
    %v485 = vpop.f32.mrb[0].mxu0
    %v486 = vpop.f32.mrb[0].mxu0
    %v487 = vadd.f32 0.0, %v486
    %v488 = vpop.f32.mrb[0].mxu0
    %489 = vmatprep.mubr.bf16.mxu0 0
    %490 = vmatmul.mubr.bf16.gmra.mrb[0].mxu0 %v407
    %v491 = vpop.f32.mrb[0].mxu0
    %v492 = vadd.f32 0.0, %v491
    %v493 = vpop.f32.mrb[0].mxu0
    %v494 = vpop.f32.mrb[0].mxu0
    %v495 = vadd.f32 0.0, %v494
    %v496 = vpop.f32.mrb[0].mxu0
    %497 = vmatprep.mubr.bf16.mxu0 0
    %498 = vmatmul.mubr.bf16.gmra.mrb[0].mxu0 %v408
    %v499 = vpop.f32.mrb[0].mxu0
    %v500 = vadd.f32 0.0, %v499
    %v501 = vpop.f32.mrb[0].mxu0
    %v502 = vpop.f32.mrb[0].mxu0
    %v503 = vadd.f32 0.0, %v502
    %v504 = vpop.f32.mrb[0].mxu0
    %505 = vdwg.mxu0
    %v506 = vpack.c.bf16 %v447, %v444
    %v507 = vpack.c.bf16 %v455, %v452
    %v508 = vpack.c.bf16 %v463, %v460
    %v509 = vpack.c.bf16 %v471, %v468
    %v510 = vpack.c.bf16 %v479, %v476
    %v511 = vpack.c.bf16 %v487, %v484
    %v512 = vpack.c.bf16 %v495, %v492
    %v513 = vpack.c.bf16 %v503, %v500
    %s514 = scalar_lea.vmem %s2, 16
    %v515 = vld [vmem:[%s514] sm:$0xf]
    %v516 = vld [vmem:[%s514 + $0x4] sm:$0xf]
    %v517 = vld [vmem:[%s514 + $0x8] sm:$0xf]
    %v518 = vld [vmem:[%s514 + $0xc] sm:$0xf]
    %v523 = vunpack.c.l.b16 %v515
    %v524 = vunpack.c.l.b16 %v516
    %v525 = vunpack.c.l.b16 %v517
    %v526 = vunpack.c.l.b16 %v518
    %v527 = vpack.c.b16 %v524, %v523
    %v528 = vpack.c.b16 %v526, %v525
    %vm531 = vcmask 261120
    %v533 = vsel %vm531, %v506, 0
    %v536 = vsel %vm531, %v507, 0
    %v539 = vsel %vm531, %v508, 0
    %v542 = vsel %vm531, %v509, 0
    %v545 = vsel %vm531, %v510, 0
    %v548 = vsel %vm531, %v511, 0
    %v551 = vsel %vm531, %v512, 0
    %v554 = vsel %vm531, %v513, 0
    %556 = vmatprep.subr.bf16.mxu0 0
    %557 = vmatpush1.bf16.msra.mxu0 %v527
    %558 = vmatprep.subr.bf16.mxu0 0
    %559 = vmatpush1.bf16.msra.mxu0 %v528
    %560 = vmatprep.subr.bf16.mxu0 0
    %561 = vmatpush1.bf16.msra.mxu0 0
    %562 = vmatprep.subr.bf16.mxu0 0
    %563 = vmatpush1.bf16.msra.mxu0 0
    %564 = vmatprep.subr.bf16.mxu0 0
    %565 = vmatpush1.bf16.msra.mxu0 0
    %566 = vmatprep.subr.bf16.mxu0 0
    %567 = vmatpush1.bf16.msra.mxu0 0
    %568 = vmatprep.subr.bf16.mxu0 0
    %569 = vmatpush1.bf16.msra.mxu0 0
    %570 = vmatprep.subr.bf16.mxu0 0
    %571 = vmatpush1.bf16.msra.mxu0 0
    %572 = vmatprep.subr.bf16.mxu0 0
    %573 = vmatpush1.bf16.msra.mxu0 0
    %574 = vmatprep.subr.bf16.mxu0 0
    %575 = vmatpush1.bf16.msra.mxu0 0
    %576 = vmatprep.subr.bf16.mxu0 0
    %577 = vmatpush1.bf16.msra.mxu0 0
    %578 = vmatprep.subr.bf16.mxu0 0
    %579 = vmatpush1.bf16.msra.mxu0 0
    %580 = vmatprep.subr.bf16.mxu0 0
    %581 = vmatpush1.bf16.msra.mxu0 0
    %582 = vmatprep.subr.bf16.mxu0 0
    %583 = vmatpush1.bf16.msra.mxu0 0
    %584 = vmatprep.subr.bf16.mxu0 0
    %585 = vmatpush1.bf16.msra.mxu0 0
    %586 = vmatprep.subr.bf16.mxu0 0
    %587 = vmatpush1.bf16.msra.mxu0 0
    %588 = vmatprep.mubr.bf16.mxu0 0
    %589 = vmatmul.mubr.bf16.gmra.mrb[0].mxu0 %v533
    %v590 = vpop.f32.mrb[0].mxu0
    %v591 = vadd.f32 0.0, %v590
    %v592 = vpop.f32.mrb[0].mxu0
    %v593 = vpop.f32.mrb[0].mxu0
    %v594 = vadd.f32 0.0, %v593
    %v595 = vpop.f32.mrb[0].mxu0
    %596 = vmatprep.mubr.bf16.mxu0 0
    %597 = vmatmul.mubr.bf16.gmra.mrb[0].mxu0 %v536
    %v598 = vpop.f32.mrb[0].mxu0
    %v599 = vadd.f32 0.0, %v598
    %v600 = vpop.f32.mrb[0].mxu0
    %v601 = vpop.f32.mrb[0].mxu0
    %v602 = vadd.f32 0.0, %v601
    %v603 = vpop.f32.mrb[0].mxu0
    %604 = vmatprep.mubr.bf16.mxu0 0
    %605 = vmatmul.mubr.bf16.gmra.mrb[0].mxu0 %v539
    %v606 = vpop.f32.mrb[0].mxu0
    %v607 = vadd.f32 0.0, %v606
    %v608 = vpop.f32.mrb[0].mxu0
    %v609 = vpop.f32.mrb[0].mxu0
    %v610 = vadd.f32 0.0, %v609
    %v611 = vpop.f32.mrb[0].mxu0
    %612 = vmatprep.mubr.bf16.mxu0 0
    %613 = vmatmul.mubr.bf16.gmra.mrb[0].mxu0 %v542
    %v614 = vpop.f32.mrb[0].mxu0
    %v615 = vadd.f32 0.0, %v614
    %v616 = vpop.f32.mrb[0].mxu0
    %v617 = vpop.f32.mrb[0].mxu0
    %v618 = vadd.f32 0.0, %v617
    %v619 = vpop.f32.mrb[0].mxu0
    %620 = vmatprep.mubr.bf16.mxu0 0
    %621 = vmatmul.mubr.bf16.gmra.mrb[0].mxu0 %v545
    %v622 = vpop.f32.mrb[0].mxu0
    %v623 = vadd.f32 0.0, %v622
    %v624 = vpop.f32.mrb[0].mxu0
    %v625 = vpop.f32.mrb[0].mxu0
    %v626 = vadd.f32 0.0, %v625
    %v627 = vpop.f32.mrb[0].mxu0
    %628 = vmatprep.mubr.bf16.mxu0 0
    %629 = vmatmul.mubr.bf16.gmra.mrb[0].mxu0 %v548
    %v630 = vpop.f32.mrb[0].mxu0
    %v631 = vadd.f32 0.0, %v630
    %v632 = vpop.f32.mrb[0].mxu0
    %v633 = vpop.f32.mrb[0].mxu0
    %v634 = vadd.f32 0.0, %v633
    %v635 = vpop.f32.mrb[0].mxu0
    %636 = vmatprep.mubr.bf16.mxu0 0
    %637 = vmatmul.mubr.bf16.gmra.mrb[0].mxu0 %v551
    %v638 = vpop.f32.mrb[0].mxu0
    %v639 = vadd.f32 0.0, %v638
    %v640 = vpop.f32.mrb[0].mxu0
    %v641 = vpop.f32.mrb[0].mxu0
    %v642 = vadd.f32 0.0, %v641
    %v643 = vpop.f32.mrb[0].mxu0
    %644 = vmatprep.mubr.bf16.mxu0 0
    %645 = vmatmul.mubr.bf16.gmra.mrb[0].mxu0 %v554
    %v646 = vpop.f32.mrb[0].mxu0
    %v647 = vadd.f32 0.0, %v646
    %v648 = vpop.f32.mrb[0].mxu0
    %v649 = vpop.f32.mrb[0].mxu0
    %v650 = vadd.f32 0.0, %v649
    %v651 = vpop.f32.mrb[0].mxu0
    %652 = vdwg.mxu0
    %v657 = vunpack.c.l.b16 %v300
    %v658 = vunpack.c.l.b16 %v301
    %v659 = vunpack.c.l.b16 %v302
    %v660 = vunpack.c.l.b16 %v303
    %v661 = vpack.c.b16 %v658, %v657
    %v662 = vpack.c.b16 %v660, %v659
    %v666 = vsel %vm531, %v292, 0
    %v669 = vsel %vm531, %v293, 0
    %v672 = vsel %vm531, %v294, 0
    %v675 = vsel %vm531, %v295, 0
    %v678 = vsel %vm531, %v296, 0
    %v681 = vsel %vm531, %v297, 0
    %v684 = vsel %vm531, %v298, 0
    %v687 = vsel %vm531, %v299, 0
    %689 = vmatprep.subr.bf16.mxu0 0
    %690 = vmatpush1.bf16.msra.mxu0 %v661
    %691 = vmatprep.subr.bf16.mxu0 0
    %692 = vmatpush1.bf16.msra.mxu0 %v662
    %693 = vmatprep.subr.bf16.mxu0 0
    %694 = vmatpush1.bf16.msra.mxu0 0
    %695 = vmatprep.subr.bf16.mxu0 0
    %696 = vmatpush1.bf16.msra.mxu0 0
    %697 = vmatprep.subr.bf16.mxu0 0
    %698 = vmatpush1.bf16.msra.mxu0 0
    %699 = vmatprep.subr.bf16.mxu0 0
    %700 = vmatpush1.bf16.msra.mxu0 0
    %701 = vmatprep.subr.bf16.mxu0 0
    %702 = vmatpush1.bf16.msra.mxu0 0
    %703 = vmatprep.subr.bf16.mxu0 0
    %704 = vmatpush1.bf16.msra.mxu0 0
    %705 = vmatprep.subr.bf16.mxu0 0
    %706 = vmatpush1.bf16.msra.mxu0 0
    %707 = vmatprep.subr.bf16.mxu0 0
    %708 = vmatpush1.bf16.msra.mxu0 0
    %709 = vmatprep.subr.bf16.mxu0 0
    %710 = vmatpush1.bf16.msra.mxu0 0
    %711 = vmatprep.subr.bf16.mxu0 0
    %712 = vmatpush1.bf16.msra.mxu0 0
    %713 = vmatprep.subr.bf16.mxu0 0
    %714 = vmatpush1.bf16.msra.mxu0 0
    %715 = vmatprep.subr.bf16.mxu0 0
    %716 = vmatpush1.bf16.msra.mxu0 0
    %717 = vmatprep.subr.bf16.mxu0 0
    %718 = vmatpush1.bf16.msra.mxu0 0
    %719 = vmatprep.subr.bf16.mxu0 0
    %720 = vmatpush1.bf16.msra.mxu0 0
    %721 = vmatprep.mubr.bf16.mxu0 0
    %722 = vmatmul.mubr.bf16.gmra.mrb[0].mxu0 %v666
    %v723 = vpop.f32.mrb[0].mxu0
    %v724 = vadd.f32 %v591, %v723
    %v725 = vpop.f32.mrb[0].mxu0
    %v726 = vpop.f32.mrb[0].mxu0
    %v727 = vadd.f32 %v594, %v726
    %v728 = vpop.f32.mrb[0].mxu0
    %729 = vmatprep.mubr.bf16.mxu0 0
    %730 = vmatmul.mubr.bf16.gmra.mrb[0].mxu0 %v669
    %v731 = vpop.f32.mrb[0].mxu0
    %v732 = vadd.f32 %v599, %v731
    %v733 = vpop.f32.mrb[0].mxu0
    %v734 = vpop.f32.mrb[0].mxu0
    %v735 = vadd.f32 %v602, %v734
    %v736 = vpop.f32.mrb[0].mxu0
    %737 = vmatprep.mubr.bf16.mxu0 0
    %738 = vmatmul.mubr.bf16.gmra.mrb[0].mxu0 %v672
    %v739 = vpop.f32.mrb[0].mxu0
    %v740 = vadd.f32 %v607, %v739
    %v741 = vpop.f32.mrb[0].mxu0
    %v742 = vpop.f32.mrb[0].mxu0
    %v743 = vadd.f32 %v610, %v742
    %v744 = vpop.f32.mrb[0].mxu0
    %745 = vmatprep.mubr.bf16.mxu0 0
    %746 = vmatmul.mubr.bf16.gmra.mrb[0].mxu0 %v675
    %v747 = vpop.f32.mrb[0].mxu0
    %v748 = vadd.f32 %v615, %v747
    %v749 = vpop.f32.mrb[0].mxu0
    %v750 = vpop.f32.mrb[0].mxu0
    %v751 = vadd.f32 %v618, %v750
    %v752 = vpop.f32.mrb[0].mxu0
    %753 = vmatprep.mubr.bf16.mxu0 0
    %754 = vmatmul.mubr.bf16.gmra.mrb[0].mxu0 %v678
    %v755 = vpop.f32.mrb[0].mxu0
    %v756 = vadd.f32 %v623, %v755
    %v757 = vpop.f32.mrb[0].mxu0
    %v758 = vpop.f32.mrb[0].mxu0
    %v759 = vadd.f32 %v626, %v758
    %v760 = vpop.f32.mrb[0].mxu0
    %761 = vmatprep.mubr.bf16.mxu0 0
    %762 = vmatmul.mubr.bf16.gmra.mrb[0].mxu0 %v681
    %v763 = vpop.f32.mrb[0].mxu0
    %v764 = vadd.f32 %v631, %v763
    %v765 = vpop.f32.mrb[0].mxu0
    %v766 = vpop.f32.mrb[0].mxu0
    %v767 = vadd.f32 %v634, %v766
    %v768 = vpop.f32.mrb[0].mxu0
    %769 = vmatprep.mubr.bf16.mxu0 0
    %770 = vmatmul.mubr.bf16.gmra.mrb[0].mxu0 %v684
    %v771 = vpop.f32.mrb[0].mxu0
    %v772 = vadd.f32 %v639, %v771
    %v773 = vpop.f32.mrb[0].mxu0
    %v774 = vpop.f32.mrb[0].mxu0
    %v775 = vadd.f32 %v642, %v774
    %v776 = vpop.f32.mrb[0].mxu0
    %777 = vmatprep.mubr.bf16.mxu0 0
    %778 = vmatmul.mubr.bf16.gmra.mrb[0].mxu0 %v687
    %v779 = vpop.f32.mrb[0].mxu0
    %v780 = vadd.f32 %v647, %v779
    %v781 = vpop.f32.mrb[0].mxu0
    %v782 = vpop.f32.mrb[0].mxu0
    %v783 = vadd.f32 %v650, %v782
    %v784 = vpop.f32.mrb[0].mxu0
    %785 = vdwg.mxu0
    %s786 = scalar_lea.vmem %s0, 256
    %v787 = vld [vmem:[%s786] sm:$0xff]
    %v788 = vld [vmem:[%s786 + $0x8] sm:$0xff]
    %v789 = vld [vmem:[%s786 + $0x10] sm:$0xff]
    %v790 = vld [vmem:[%s786 + $0x18] sm:$0xff]
    %v791 = vld [vmem:[%s786 + $0x20] sm:$0xff]
    %v792 = vld [vmem:[%s786 + $0x28] sm:$0xff]
    %v793 = vld [vmem:[%s786 + $0x30] sm:$0xff]
    %v794 = vld [vmem:[%s786 + $0x38] sm:$0xff]
    %v795 = vld [vmem:[%s786 + $0x40] sm:$0xff]
    %v796 = vld [vmem:[%s786 + $0x48] sm:$0xff]
    %v797 = vld [vmem:[%s786 + $0x50] sm:$0xff]
    %v798 = vld [vmem:[%s786 + $0x58] sm:$0xff]
    %v799 = vld [vmem:[%s786 + $0x60] sm:$0xff]
    %v800 = vld [vmem:[%s786 + $0x68] sm:$0xff]
    %v801 = vld [vmem:[%s786 + $0x70] sm:$0xff]
    %v802 = vld [vmem:[%s786 + $0x78] sm:$0xff]
    %803 = vset.pattern.permute.xlu0 0
    %804 = vperm.xlu0 %803, %v787
    %v805 = vpop.permute.xlu0 %804
    %806 = vset.pattern.permute.xlu0 0
    %807 = vperm.xlu0 %806, %v788
    %v808 = vpop.permute.xlu0 %807
    %809 = vset.pattern.permute.xlu0 0
    %810 = vperm.xlu0 %809, %v789
    %v811 = vpop.permute.xlu0 %810
    %812 = vset.pattern.permute.xlu0 0
    %813 = vperm.xlu0 %812, %v790
    %v814 = vpop.permute.xlu0 %813
    %815 = vset.pattern.permute.xlu0 0
    %816 = vperm.xlu0 %815, %v791
    %v817 = vpop.permute.xlu0 %816
    %818 = vset.pattern.permute.xlu0 0
    %819 = vperm.xlu0 %818, %v792
    %v820 = vpop.permute.xlu0 %819
    %821 = vset.pattern.permute.xlu0 0
    %822 = vperm.xlu0 %821, %v793
    %v823 = vpop.permute.xlu0 %822
    %824 = vset.pattern.permute.xlu0 0
    %825 = vperm.xlu0 %824, %v794
    %v826 = vpop.permute.xlu0 %825
    %827 = vset.pattern.permute.xlu0 0
    %828 = vperm.xlu0 %827, %v795
    %v829 = vpop.permute.xlu0 %828
    %830 = vset.pattern.permute.xlu0 0
    %831 = vperm.xlu0 %830, %v796
    %v832 = vpop.permute.xlu0 %831
    %833 = vset.pattern.permute.xlu0 0
    %834 = vperm.xlu0 %833, %v797
    %v835 = vpop.permute.xlu0 %834
    %836 = vset.pattern.permute.xlu0 0
    %837 = vperm.xlu0 %836, %v798
    %v838 = vpop.permute.xlu0 %837
    %839 = vset.pattern.permute.xlu0 0
    %840 = vperm.xlu0 %839, %v799
    %v841 = vpop.permute.xlu0 %840
    %842 = vset.pattern.permute.xlu0 0
    %843 = vperm.xlu0 %842, %v800
    %v844 = vpop.permute.xlu0 %843
    %845 = vset.pattern.permute.xlu0 0
    %846 = vperm.xlu0 %845, %v801
    %v847 = vpop.permute.xlu0 %846
    %848 = vset.pattern.permute.xlu0 0
    %849 = vperm.xlu0 %848, %v802
    %v850 = vpop.permute.xlu0 %849
    %vm851 = vcmp.eq.s32.totalorder %v42, %v805
    %vm852 = vcmp.eq.s32.totalorder %v42, %v808
    %vm853 = vcmp.eq.s32.totalorder %v42, %v811
    %vm854 = vcmp.eq.s32.totalorder %v42, %v814
    %vm855 = vcmp.eq.s32.totalorder %v42, %v817
    %vm856 = vcmp.eq.s32.totalorder %v42, %v820
    %vm857 = vcmp.eq.s32.totalorder %v42, %v823
    %vm858 = vcmp.eq.s32.totalorder %v42, %v826
    %vm859 = vcmp.eq.s32.totalorder %v42, %v829
    %vm860 = vcmp.eq.s32.totalorder %v42, %v832
    %vm861 = vcmp.eq.s32.totalorder %v42, %v835
    %vm862 = vcmp.eq.s32.totalorder %v42, %v838
    %vm863 = vcmp.eq.s32.totalorder %v42, %v841
    %vm864 = vcmp.eq.s32.totalorder %v42, %v844
    %vm865 = vcmp.eq.s32.totalorder %v42, %v847
    %vm866 = vcmp.eq.s32.totalorder %v42, %v850
    %v867 = vsel %vm851, 1.0, 0.0
    %v868 = vsel %vm852, 1.0, 0.0
    %v869 = vsel %vm853, 1.0, 0.0
    %v870 = vsel %vm854, 1.0, 0.0
    %v871 = vsel %vm855, 1.0, 0.0
    %v872 = vsel %vm856, 1.0, 0.0
    %v873 = vsel %vm857, 1.0, 0.0
    %v874 = vsel %vm858, 1.0, 0.0
    %v875 = vsel %vm859, 1.0, 0.0
    %v876 = vsel %vm860, 1.0, 0.0
    %v877 = vsel %vm861, 1.0, 0.0
    %v878 = vsel %vm862, 1.0, 0.0
    %v879 = vsel %vm863, 1.0, 0.0
    %v880 = vsel %vm864, 1.0, 0.0
    %v881 = vsel %vm865, 1.0, 0.0
    %v882 = vsel %vm866, 1.0, 0.0
    %v883 = vpack.c.bf16 %v868, %v867
    %v884 = vpack.c.bf16 %v870, %v869
    %v885 = vpack.c.bf16 %v872, %v871
    %v886 = vpack.c.bf16 %v874, %v873
    %v887 = vpack.c.bf16 %v876, %v875
    %v888 = vpack.c.bf16 %v878, %v877
    %v889 = vpack.c.bf16 %v880, %v879
    %v890 = vpack.c.bf16 %v882, %v881
    %891 = vmatprep.subr.bf16.mxu0 0
    %892 = vmatpush1.bf16.msra.mxu0 %v179
    %893 = vmatprep.subr.bf16.mxu0 0
    %894 = vmatpush1.bf16.msra.mxu0 %v180
    %895 = vmatprep.subr.bf16.mxu0 0
    %896 = vmatpush1.bf16.msra.mxu0 %v181
    %897 = vmatprep.subr.bf16.mxu0 0
    %898 = vmatpush1.bf16.msra.mxu0 %v182
    %899 = vmatprep.subr.bf16.mxu0 0
    %900 = vmatpush1.bf16.msra.mxu0 %v183
    %901 = vmatprep.subr.bf16.mxu0 0
    %902 = vmatpush1.bf16.msra.mxu0 %v184
    %903 = vmatprep.subr.bf16.mxu0 0
    %904 = vmatpush1.bf16.msra.mxu0 %v185
    %905 = vmatprep.subr.bf16.mxu0 0
    %906 = vmatpush1.bf16.msra.mxu0 %v186
    %907 = vmatprep.subr.bf16.mxu0 0
    %908 = vmatpush1.bf16.msra.mxu0 0
    %909 = vmatprep.subr.bf16.mxu0 0
    %910 = vmatpush1.bf16.msra.mxu0 0
    %911 = vmatprep.subr.bf16.mxu0 0
    %912 = vmatpush1.bf16.msra.mxu0 0
    %913 = vmatprep.subr.bf16.mxu0 0
    %914 = vmatpush1.bf16.msra.mxu0 0
    %915 = vmatprep.subr.bf16.mxu0 0
    %916 = vmatpush1.bf16.msra.mxu0 0
    %917 = vmatprep.subr.bf16.mxu0 0
    %918 = vmatpush1.bf16.msra.mxu0 0
    %919 = vmatprep.subr.bf16.mxu0 0
    %920 = vmatpush1.bf16.msra.mxu0 0
    %921 = vmatprep.subr.bf16.mxu0 0
    %922 = vmatpush1.bf16.msra.mxu0 0
    %923 = vmatprep.mubr.bf16.mxu0 0
    %924 = vmatmul.mubr.bf16.gmra.mrb[0].mxu0 %v883
    %v925 = vpop.f32.mrb[0].mxu0
    %v926 = vadd.f32 0.0, %v925
    %v927 = vpop.f32.mrb[0].mxu0
    %v928 = vpop.f32.mrb[0].mxu0
    %v929 = vadd.f32 0.0, %v928
    %v930 = vpop.f32.mrb[0].mxu0
    %931 = vmatprep.mubr.bf16.mxu0 0
    %932 = vmatmul.mubr.bf16.gmra.mrb[0].mxu0 %v884
    %v933 = vpop.f32.mrb[0].mxu0
    %v934 = vadd.f32 0.0, %v933
    %v935 = vpop.f32.mrb[0].mxu0
    %v936 = vpop.f32.mrb[0].mxu0
    %v937 = vadd.f32 0.0, %v936
    %v938 = vpop.f32.mrb[0].mxu0
    %939 = vmatprep.mubr.bf16.mxu0 0
    %940 = vmatmul.mubr.bf16.gmra.mrb[0].mxu0 %v885
    %v941 = vpop.f32.mrb[0].mxu0
    %v942 = vadd.f32 0.0, %v941
    %v943 = vpop.f32.mrb[0].mxu0
    %v944 = vpop.f32.mrb[0].mxu0
    %v945 = vadd.f32 0.0, %v944
    %v946 = vpop.f32.mrb[0].mxu0
    %947 = vmatprep.mubr.bf16.mxu0 0
    %948 = vmatmul.mubr.bf16.gmra.mrb[0].mxu0 %v886
    %v949 = vpop.f32.mrb[0].mxu0
    %v950 = vadd.f32 0.0, %v949
    %v951 = vpop.f32.mrb[0].mxu0
    %v952 = vpop.f32.mrb[0].mxu0
    %v953 = vadd.f32 0.0, %v952
    %v954 = vpop.f32.mrb[0].mxu0
    %955 = vmatprep.mubr.bf16.mxu0 0
    %956 = vmatmul.mubr.bf16.gmra.mrb[0].mxu0 %v887
    %v957 = vpop.f32.mrb[0].mxu0
    %v958 = vadd.f32 0.0, %v957
    %v959 = vpop.f32.mrb[0].mxu0
    %v960 = vpop.f32.mrb[0].mxu0
    %v961 = vadd.f32 0.0, %v960
    %v962 = vpop.f32.mrb[0].mxu0
    %963 = vmatprep.mubr.bf16.mxu0 0
    %964 = vmatmul.mubr.bf16.gmra.mrb[0].mxu0 %v888
    %v965 = vpop.f32.mrb[0].mxu0
    %v966 = vadd.f32 0.0, %v965
    %v967 = vpop.f32.mrb[0].mxu0
    %v968 = vpop.f32.mrb[0].mxu0
    %v969 = vadd.f32 0.0, %v968
    %v970 = vpop.f32.mrb[0].mxu0
    %971 = vmatprep.mubr.bf16.mxu0 0
    %972 = vmatmul.mubr.bf16.gmra.mrb[0].mxu0 %v889
    %v973 = vpop.f32.mrb[0].mxu0
    %v974 = vadd.f32 0.0, %v973
    %v975 = vpop.f32.mrb[0].mxu0
    %v976 = vpop.f32.mrb[0].mxu0
    %v977 = vadd.f32 0.0, %v976
    %v978 = vpop.f32.mrb[0].mxu0
    %979 = vmatprep.mubr.bf16.mxu0 0
    %980 = vmatmul.mubr.bf16.gmra.mrb[0].mxu0 %v890
    %v981 = vpop.f32.mrb[0].mxu0
    %v982 = vadd.f32 0.0, %v981
    %v983 = vpop.f32.mrb[0].mxu0
    %v984 = vpop.f32.mrb[0].mxu0
    %v985 = vadd.f32 0.0, %v984
    %v986 = vpop.f32.mrb[0].mxu0
    %987 = vdwg.mxu0
    %v988 = vpack.c.bf16 %v929, %v926
    %v989 = vpack.c.bf16 %v937, %v934
    %v990 = vpack.c.bf16 %v945, %v942
    %v991 = vpack.c.bf16 %v953, %v950
    %v992 = vpack.c.bf16 %v961, %v958
    %v993 = vpack.c.bf16 %v969, %v966
    %v994 = vpack.c.bf16 %v977, %v974
    %v995 = vpack.c.bf16 %v985, %v982
    %s996 = scalar_lea.vmem %s2, 32
    %v997 = vld [vmem:[%s996] sm:$0xf]
    %v998 = vld [vmem:[%s996 + $0x4] sm:$0xf]
    %v999 = vld [vmem:[%s996 + $0x8] sm:$0xf]
    %v1000 = vld [vmem:[%s996 + $0xc] sm:$0xf]
    %v1005 = vunpack.c.l.b16 %v997
    %v1006 = vunpack.c.l.b16 %v998
    %v1007 = vunpack.c.l.b16 %v999
    %v1008 = vunpack.c.l.b16 %v1000
    %v1009 = vpack.c.b16 %v1006, %v1005
    %v1010 = vpack.c.b16 %v1008, %v1007
    %v1014 = vsel %vm531, %v988, 0
    %v1017 = vsel %vm531, %v989, 0
    %v1020 = vsel %vm531, %v990, 0
    %v1023 = vsel %vm531, %v991, 0
    %v1026 = vsel %vm531, %v992, 0
    %v1029 = vsel %vm531, %v993, 0
    %v1032 = vsel %vm531, %v994, 0
    %v1035 = vsel %vm531, %v995, 0
    %1037 = vmatprep.subr.bf16.mxu0 0
    %1038 = vmatpush1.bf16.msra.mxu0 %v1009
    %1039 = vmatprep.subr.bf16.mxu0 0
    %1040 = vmatpush1.bf16.msra.mxu0 %v1010
    %1041 = vmatprep.subr.bf16.mxu0 0
    %1042 = vmatpush1.bf16.msra.mxu0 0
    %1043 = vmatprep.subr.bf16.mxu0 0
    %1044 = vmatpush1.bf16.msra.mxu0 0
    %1045 = vmatprep.subr.bf16.mxu0 0
    %1046 = vmatpush1.bf16.msra.mxu0 0
    %1047 = vmatprep.subr.bf16.mxu0 0
    %1048 = vmatpush1.bf16.msra.mxu0 0
    %1049 = vmatprep.subr.bf16.mxu0 0
    %1050 = vmatpush1.bf16.msra.mxu0 0
    %1051 = vmatprep.subr.bf16.mxu0 0
    %1052 = vmatpush1.bf16.msra.mxu0 0
    %1053 = vmatprep.subr.bf16.mxu0 0
    %1054 = vmatpush1.bf16.msra.mxu0 0
    %1055 = vmatprep.subr.bf16.mxu0 0
    %1056 = vmatpush1.bf16.msra.mxu0 0
    %1057 = vmatprep.subr.bf16.mxu0 0
    %1058 = vmatpush1.bf16.msra.mxu0 0
    %1059 = vmatprep.subr.bf16.mxu0 0
    %1060 = vmatpush1.bf16.msra.mxu0 0
    %1061 = vmatprep.subr.bf16.mxu0 0
    %1062 = vmatpush1.bf16.msra.mxu0 0
    %1063 = vmatprep.subr.bf16.mxu0 0
    %1064 = vmatpush1.bf16.msra.mxu0 0
    %1065 = vmatprep.subr.bf16.mxu0 0
    %1066 = vmatpush1.bf16.msra.mxu0 0
    %1067 = vmatprep.subr.bf16.mxu0 0
    %1068 = vmatpush1.bf16.msra.mxu0 0
    %1069 = vmatprep.mubr.bf16.mxu0 0
    %1070 = vmatmul.mubr.bf16.gmra.mrb[0].mxu0 %v1014
    %v1071 = vpop.f32.mrb[0].mxu0
    %v1072 = vadd.f32 0.0, %v1071
    %v1073 = vpop.f32.mrb[0].mxu0
    %v1074 = vpop.f32.mrb[0].mxu0
    %v1075 = vadd.f32 0.0, %v1074
    %v1076 = vpop.f32.mrb[0].mxu0
    %1077 = vmatprep.mubr.bf16.mxu0 0
    %1078 = vmatmul.mubr.bf16.gmra.mrb[0].mxu0 %v1017
    %v1079 = vpop.f32.mrb[0].mxu0
    %v1080 = vadd.f32 0.0, %v1079
    %v1081 = vpop.f32.mrb[0].mxu0
    %v1082 = vpop.f32.mrb[0].mxu0
    %v1083 = vadd.f32 0.0, %v1082
    %v1084 = vpop.f32.mrb[0].mxu0
    %1085 = vmatprep.mubr.bf16.mxu0 0
    %1086 = vmatmul.mubr.bf16.gmra.mrb[0].mxu0 %v1020
    %v1087 = vpop.f32.mrb[0].mxu0
    %v1088 = vadd.f32 0.0, %v1087
    %v1089 = vpop.f32.mrb[0].mxu0
    %v1090 = vpop.f32.mrb[0].mxu0
    %v1091 = vadd.f32 0.0, %v1090
    %v1092 = vpop.f32.mrb[0].mxu0
    %1093 = vmatprep.mubr.bf16.mxu0 0
    %1094 = vmatmul.mubr.bf16.gmra.mrb[0].mxu0 %v1023
    %v1095 = vpop.f32.mrb[0].mxu0
    %v1096 = vadd.f32 0.0, %v1095
    %v1097 = vpop.f32.mrb[0].mxu0
    %v1098 = vpop.f32.mrb[0].mxu0
    %v1099 = vadd.f32 0.0, %v1098
    %v1100 = vpop.f32.mrb[0].mxu0
    %1101 = vmatprep.mubr.bf16.mxu0 0
    %1102 = vmatmul.mubr.bf16.gmra.mrb[0].mxu0 %v1026
    %v1103 = vpop.f32.mrb[0].mxu0
    %v1104 = vadd.f32 0.0, %v1103
    %v1105 = vpop.f32.mrb[0].mxu0
    %v1106 = vpop.f32.mrb[0].mxu0
    %v1107 = vadd.f32 0.0, %v1106
    %v1108 = vpop.f32.mrb[0].mxu0
    %1109 = vmatprep.mubr.bf16.mxu0 0
    %1110 = vmatmul.mubr.bf16.gmra.mrb[0].mxu0 %v1029
    %v1111 = vpop.f32.mrb[0].mxu0
    %v1112 = vadd.f32 0.0, %v1111
    %v1113 = vpop.f32.mrb[0].mxu0
    %v1114 = vpop.f32.mrb[0].mxu0
    %v1115 = vadd.f32 0.0, %v1114
    %v1116 = vpop.f32.mrb[0].mxu0
    %1117 = vmatprep.mubr.bf16.mxu0 0
    %1118 = vmatmul.mubr.bf16.gmra.mrb[0].mxu0 %v1032
    %v1119 = vpop.f32.mrb[0].mxu0
    %v1120 = vadd.f32 0.0, %v1119
    %v1121 = vpop.f32.mrb[0].mxu0
    %v1122 = vpop.f32.mrb[0].mxu0
    %v1123 = vadd.f32 0.0, %v1122
    %v1124 = vpop.f32.mrb[0].mxu0
    %1125 = vmatprep.mubr.bf16.mxu0 0
    %1126 = vmatmul.mubr.bf16.gmra.mrb[0].mxu0 %v1035
    %v1127 = vpop.f32.mrb[0].mxu0
    %v1128 = vadd.f32 0.0, %v1127
    %v1129 = vpop.f32.mrb[0].mxu0
    %v1130 = vpop.f32.mrb[0].mxu0
    %v1131 = vadd.f32 0.0, %v1130
    %v1132 = vpop.f32.mrb[0].mxu0
    %1133 = vdwg.mxu0
    %v1134 = vadd.f32 %v724, %v1072
    %v1135 = vadd.f32 %v727, %v1075
    %v1136 = vadd.f32 %v732, %v1080
    %v1137 = vadd.f32 %v735, %v1083
    %v1138 = vadd.f32 %v740, %v1088
    %v1139 = vadd.f32 %v743, %v1091
    %v1140 = vadd.f32 %v748, %v1096
    %v1141 = vadd.f32 %v751, %v1099
    %v1142 = vadd.f32 %v756, %v1104
    %v1143 = vadd.f32 %v759, %v1107
    %v1144 = vadd.f32 %v764, %v1112
    %v1145 = vadd.f32 %v767, %v1115
    %v1146 = vadd.f32 %v772, %v1120
    %v1147 = vadd.f32 %v775, %v1123
    %v1148 = vadd.f32 %v780, %v1128
    %v1149 = vadd.f32 %v783, %v1131
    %s1150 = scalar_lea.vmem %s0, 384
    %v1151 = vld [vmem:[%s1150] sm:$0xff]
    %v1152 = vld [vmem:[%s1150 + $0x8] sm:$0xff]
    %v1153 = vld [vmem:[%s1150 + $0x10] sm:$0xff]
    %v1154 = vld [vmem:[%s1150 + $0x18] sm:$0xff]
    %v1155 = vld [vmem:[%s1150 + $0x20] sm:$0xff]
    %v1156 = vld [vmem:[%s1150 + $0x28] sm:$0xff]
    %v1157 = vld [vmem:[%s1150 + $0x30] sm:$0xff]
    %v1158 = vld [vmem:[%s1150 + $0x38] sm:$0xff]
    %v1159 = vld [vmem:[%s1150 + $0x40] sm:$0xff]
    %v1160 = vld [vmem:[%s1150 + $0x48] sm:$0xff]
    %v1161 = vld [vmem:[%s1150 + $0x50] sm:$0xff]
    %v1162 = vld [vmem:[%s1150 + $0x58] sm:$0xff]
    %v1163 = vld [vmem:[%s1150 + $0x60] sm:$0xff]
    %v1164 = vld [vmem:[%s1150 + $0x68] sm:$0xff]
    %v1165 = vld [vmem:[%s1150 + $0x70] sm:$0xff]
    %v1166 = vld [vmem:[%s1150 + $0x78] sm:$0xff]
    %1167 = vset.pattern.permute.xlu0 0
    %1168 = vperm.xlu0 %1167, %v1151
    %v1169 = vpop.permute.xlu0 %1168
    %1170 = vset.pattern.permute.xlu0 0
    %1171 = vperm.xlu0 %1170, %v1152
    %v1172 = vpop.permute.xlu0 %1171
    %1173 = vset.pattern.permute.xlu0 0
    %1174 = vperm.xlu0 %1173, %v1153
    %v1175 = vpop.permute.xlu0 %1174
    %1176 = vset.pattern.permute.xlu0 0
    %1177 = vperm.xlu0 %1176, %v1154
    %v1178 = vpop.permute.xlu0 %1177
    %1179 = vset.pattern.permute.xlu0 0
    %1180 = vperm.xlu0 %1179, %v1155
    %v1181 = vpop.permute.xlu0 %1180
    %1182 = vset.pattern.permute.xlu0 0
    %1183 = vperm.xlu0 %1182, %v1156
    %v1184 = vpop.permute.xlu0 %1183
    %1185 = vset.pattern.permute.xlu0 0
    %1186 = vperm.xlu0 %1185, %v1157
    %v1187 = vpop.permute.xlu0 %1186
    %1188 = vset.pattern.permute.xlu0 0
    %1189 = vperm.xlu0 %1188, %v1158
    %v1190 = vpop.permute.xlu0 %1189
    %1191 = vset.pattern.permute.xlu0 0
    %1192 = vperm.xlu0 %1191, %v1159
    %v1193 = vpop.permute.xlu0 %1192
    %1194 = vset.pattern.permute.xlu0 0
    %1195 = vperm.xlu0 %1194, %v1160
    %v1196 = vpop.permute.xlu0 %1195
    %1197 = vset.pattern.permute.xlu0 0
    %1198 = vperm.xlu0 %1197, %v1161
    %v1199 = vpop.permute.xlu0 %1198
    %1200 = vset.pattern.permute.xlu0 0
    %1201 = vperm.xlu0 %1200, %v1162
    %v1202 = vpop.permute.xlu0 %1201
    %1203 = vset.pattern.permute.xlu0 0
    %1204 = vperm.xlu0 %1203, %v1163
    %v1205 = vpop.permute.xlu0 %1204
    %1206 = vset.pattern.permute.xlu0 0
    %1207 = vperm.xlu0 %1206, %v1164
    %v1208 = vpop.permute.xlu0 %1207
    %1209 = vset.pattern.permute.xlu0 0
    %1210 = vperm.xlu0 %1209, %v1165
    %v1211 = vpop.permute.xlu0 %1210
    %1212 = vset.pattern.permute.xlu0 0
    %1213 = vperm.xlu0 %1212, %v1166
    %v1214 = vpop.permute.xlu0 %1213
    %vm1215 = vcmp.eq.s32.totalorder %v42, %v1169
    %vm1216 = vcmp.eq.s32.totalorder %v42, %v1172
    %vm1217 = vcmp.eq.s32.totalorder %v42, %v1175
    %vm1218 = vcmp.eq.s32.totalorder %v42, %v1178
    %vm1219 = vcmp.eq.s32.totalorder %v42, %v1181
    %vm1220 = vcmp.eq.s32.totalorder %v42, %v1184
    %vm1221 = vcmp.eq.s32.totalorder %v42, %v1187
    %vm1222 = vcmp.eq.s32.totalorder %v42, %v1190
    %vm1223 = vcmp.eq.s32.totalorder %v42, %v1193
    %vm1224 = vcmp.eq.s32.totalorder %v42, %v1196
    %vm1225 = vcmp.eq.s32.totalorder %v42, %v1199
    %vm1226 = vcmp.eq.s32.totalorder %v42, %v1202
    %vm1227 = vcmp.eq.s32.totalorder %v42, %v1205
    %vm1228 = vcmp.eq.s32.totalorder %v42, %v1208
    %vm1229 = vcmp.eq.s32.totalorder %v42, %v1211
    %vm1230 = vcmp.eq.s32.totalorder %v42, %v1214
    %v1231 = vsel %vm1215, 1.0, 0.0
    %v1232 = vsel %vm1216, 1.0, 0.0
    %v1233 = vsel %vm1217, 1.0, 0.0
    %v1234 = vsel %vm1218, 1.0, 0.0
    %v1235 = vsel %vm1219, 1.0, 0.0
    %v1236 = vsel %vm1220, 1.0, 0.0
    %v1237 = vsel %vm1221, 1.0, 0.0
    %v1238 = vsel %vm1222, 1.0, 0.0
    %v1239 = vsel %vm1223, 1.0, 0.0
    %v1240 = vsel %vm1224, 1.0, 0.0
    %v1241 = vsel %vm1225, 1.0, 0.0
    %v1242 = vsel %vm1226, 1.0, 0.0
    %v1243 = vsel %vm1227, 1.0, 0.0
    %v1244 = vsel %vm1228, 1.0, 0.0
    %v1245 = vsel %vm1229, 1.0, 0.0
    %v1246 = vsel %vm1230, 1.0, 0.0
    %v1247 = vpack.c.bf16 %v1232, %v1231
    %v1248 = vpack.c.bf16 %v1234, %v1233
    %v1249 = vpack.c.bf16 %v1236, %v1235
    %v1250 = vpack.c.bf16 %v1238, %v1237
    %v1251 = vpack.c.bf16 %v1240, %v1239
    %v1252 = vpack.c.bf16 %v1242, %v1241
    %v1253 = vpack.c.bf16 %v1244, %v1243
    %v1254 = vpack.c.bf16 %v1246, %v1245
    %1255 = vmatprep.subr.bf16.mxu0 0
    %1256 = vmatpush1.bf16.msra.mxu0 %v179
    %1257 = vmatprep.subr.bf16.mxu0 0
    %1258 = vmatpush1.bf16.msra.mxu0 %v180
    %1259 = vmatprep.subr.bf16.mxu0 0
    %1260 = vmatpush1.bf16.msra.mxu0 %v181
    %1261 = vmatprep.subr.bf16.mxu0 0
    %1262 = vmatpush1.bf16.msra.mxu0 %v182
    %1263 = vmatprep.subr.bf16.mxu0 0
    %1264 = vmatpush1.bf16.msra.mxu0 %v183
    %1265 = vmatprep.subr.bf16.mxu0 0
    %1266 = vmatpush1.bf16.msra.mxu0 %v184
    %1267 = vmatprep.subr.bf16.mxu0 0
    %1268 = vmatpush1.bf16.msra.mxu0 %v185
    %1269 = vmatprep.subr.bf16.mxu0 0
    %1270 = vmatpush1.bf16.msra.mxu0 %v186
    %1271 = vmatprep.subr.bf16.mxu0 0
    %1272 = vmatpush1.bf16.msra.mxu0 0
    %1273 = vmatprep.subr.bf16.mxu0 0
    %1274 = vmatpush1.bf16.msra.mxu0 0
    %1275 = vmatprep.subr.bf16.mxu0 0
    %1276 = vmatpush1.bf16.msra.mxu0 0
    %1277 = vmatprep.subr.bf16.mxu0 0
    %1278 = vmatpush1.bf16.msra.mxu0 0
    %1279 = vmatprep.subr.bf16.mxu0 0
    %1280 = vmatpush1.bf16.msra.mxu0 0
    %1281 = vmatprep.subr.bf16.mxu0 0
    %1282 = vmatpush1.bf16.msra.mxu0 0
    %1283 = vmatprep.subr.bf16.mxu0 0
    %1284 = vmatpush1.bf16.msra.mxu0 0
    %1285 = vmatprep.subr.bf16.mxu0 0
    %1286 = vmatpush1.bf16.msra.mxu0 0
    %1287 = vmatprep.mubr.bf16.mxu0 0
    %1288 = vmatmul.mubr.bf16.gmra.mrb[0].mxu0 %v1247
    %v1289 = vpop.f32.mrb[0].mxu0
    %v1290 = vadd.f32 0.0, %v1289
    %v1291 = vpop.f32.mrb[0].mxu0
    %v1292 = vpop.f32.mrb[0].mxu0
    %v1293 = vadd.f32 0.0, %v1292
    %v1294 = vpop.f32.mrb[0].mxu0
    %1295 = vmatprep.mubr.bf16.mxu0 0
    %1296 = vmatmul.mubr.bf16.gmra.mrb[0].mxu0 %v1248
    %v1297 = vpop.f32.mrb[0].mxu0
    %v1298 = vadd.f32 0.0, %v1297
    %v1299 = vpop.f32.mrb[0].mxu0
    %v1300 = vpop.f32.mrb[0].mxu0
    %v1301 = vadd.f32 0.0, %v1300
    %v1302 = vpop.f32.mrb[0].mxu0
    %1303 = vmatprep.mubr.bf16.mxu0 0
    %1304 = vmatmul.mubr.bf16.gmra.mrb[0].mxu0 %v1249
    %v1305 = vpop.f32.mrb[0].mxu0
    %v1306 = vadd.f32 0.0, %v1305
    %v1307 = vpop.f32.mrb[0].mxu0
    %v1308 = vpop.f32.mrb[0].mxu0
    %v1309 = vadd.f32 0.0, %v1308
    %v1310 = vpop.f32.mrb[0].mxu0
    %1311 = vmatprep.mubr.bf16.mxu0 0
    %1312 = vmatmul.mubr.bf16.gmra.mrb[0].mxu0 %v1250
    %v1313 = vpop.f32.mrb[0].mxu0
    %v1314 = vadd.f32 0.0, %v1313
    %v1315 = vpop.f32.mrb[0].mxu0
    %v1316 = vpop.f32.mrb[0].mxu0
    %v1317 = vadd.f32 0.0, %v1316
    %v1318 = vpop.f32.mrb[0].mxu0
    %1319 = vmatprep.mubr.bf16.mxu0 0
    %1320 = vmatmul.mubr.bf16.gmra.mrb[0].mxu0 %v1251
    %v1321 = vpop.f32.mrb[0].mxu0
    %v1322 = vadd.f32 0.0, %v1321
    %v1323 = vpop.f32.mrb[0].mxu0
    %v1324 = vpop.f32.mrb[0].mxu0
    %v1325 = vadd.f32 0.0, %v1324
    %v1326 = vpop.f32.mrb[0].mxu0
    %1327 = vmatprep.mubr.bf16.mxu0 0
    %1328 = vmatmul.mubr.bf16.gmra.mrb[0].mxu0 %v1252
    %v1329 = vpop.f32.mrb[0].mxu0
    %v1330 = vadd.f32 0.0, %v1329
    %v1331 = vpop.f32.mrb[0].mxu0
    %v1332 = vpop.f32.mrb[0].mxu0
    %v1333 = vadd.f32 0.0, %v1332
    %v1334 = vpop.f32.mrb[0].mxu0
    %1335 = vmatprep.mubr.bf16.mxu0 0
    %1336 = vmatmul.mubr.bf16.gmra.mrb[0].mxu0 %v1253
    %v1337 = vpop.f32.mrb[0].mxu0
    %v1338 = vadd.f32 0.0, %v1337
    %v1339 = vpop.f32.mrb[0].mxu0
    %v1340 = vpop.f32.mrb[0].mxu0
    %v1341 = vadd.f32 0.0, %v1340
    %v1342 = vpop.f32.mrb[0].mxu0
    %1343 = vmatprep.mubr.bf16.mxu0 0
    %1344 = vmatmul.mubr.bf16.gmra.mrb[0].mxu0 %v1254
    %v1345 = vpop.f32.mrb[0].mxu0
    %v1346 = vadd.f32 0.0, %v1345
    %v1347 = vpop.f32.mrb[0].mxu0
    %v1348 = vpop.f32.mrb[0].mxu0
    %v1349 = vadd.f32 0.0, %v1348
    %v1350 = vpop.f32.mrb[0].mxu0
    %1351 = vdwg.mxu0
    %v1352 = vpack.c.bf16 %v1293, %v1290
    %v1353 = vpack.c.bf16 %v1301, %v1298
    %v1354 = vpack.c.bf16 %v1309, %v1306
    %v1355 = vpack.c.bf16 %v1317, %v1314
    %v1356 = vpack.c.bf16 %v1325, %v1322
    %v1357 = vpack.c.bf16 %v1333, %v1330
    %v1358 = vpack.c.bf16 %v1341, %v1338
    %v1359 = vpack.c.bf16 %v1349, %v1346
    %s1360 = scalar_lea.vmem %s2, 48
    %v1361 = vld [vmem:[%s1360] sm:$0xf]
    %v1362 = vld [vmem:[%s1360 + $0x4] sm:$0xf]
    %v1363 = vld [vmem:[%s1360 + $0x8] sm:$0xf]
    %v1364 = vld [vmem:[%s1360 + $0xc] sm:$0xf]
    %v1369 = vunpack.c.l.b16 %v1361
    %v1370 = vunpack.c.l.b16 %v1362
    %v1371 = vunpack.c.l.b16 %v1363
    %v1372 = vunpack.c.l.b16 %v1364
    %v1373 = vpack.c.b16 %v1370, %v1369
    %v1374 = vpack.c.b16 %v1372, %v1371
    %v1378 = vsel %vm531, %v1352, 0
    %v1381 = vsel %vm531, %v1353, 0
    %v1384 = vsel %vm531, %v1354, 0
    %v1387 = vsel %vm531, %v1355, 0
    %v1390 = vsel %vm531, %v1356, 0
    %v1393 = vsel %vm531, %v1357, 0
    %v1396 = vsel %vm531, %v1358, 0
    %v1399 = vsel %vm531, %v1359, 0
    %1401 = vmatprep.subr.bf16.mxu0 0
    %1402 = vmatpush1.bf16.msra.mxu0 %v1373
    %1403 = vmatprep.subr.bf16.mxu0 0
    %1404 = vmatpush1.bf16.msra.mxu0 %v1374
    %1405 = vmatprep.subr.bf16.mxu0 0
    %1406 = vmatpush1.bf16.msra.mxu0 0
    %1407 = vmatprep.subr.bf16.mxu0 0
    %1408 = vmatpush1.bf16.msra.mxu0 0
    %1409 = vmatprep.subr.bf16.mxu0 0
    %1410 = vmatpush1.bf16.msra.mxu0 0
    %1411 = vmatprep.subr.bf16.mxu0 0
    %1412 = vmatpush1.bf16.msra.mxu0 0
    %1413 = vmatprep.subr.bf16.mxu0 0
    %1414 = vmatpush1.bf16.msra.mxu0 0
    %1415 = vmatprep.subr.bf16.mxu0 0
    %1416 = vmatpush1.bf16.msra.mxu0 0
    %1417 = vmatprep.subr.bf16.mxu0 0
    %1418 = vmatpush1.bf16.msra.mxu0 0
    %1419 = vmatprep.subr.bf16.mxu0 0
    %1420 = vmatpush1.bf16.msra.mxu0 0
    %1421 = vmatprep.subr.bf16.mxu0 0
    %1422 = vmatpush1.bf16.msra.mxu0 0
    %1423 = vmatprep.subr.bf16.mxu0 0
    %1424 = vmatpush1.bf16.msra.mxu0 0
    %1425 = vmatprep.subr.bf16.mxu0 0
    %1426 = vmatpush1.bf16.msra.mxu0 0
    %1427 = vmatprep.subr.bf16.mxu0 0
    %1428 = vmatpush1.bf16.msra.mxu0 0
    %1429 = vmatprep.subr.bf16.mxu0 0
    %1430 = vmatpush1.bf16.msra.mxu0 0
    %1431 = vmatprep.subr.bf16.mxu0 0
    %1432 = vmatpush1.bf16.msra.mxu0 0
    %1433 = vmatprep.mubr.bf16.mxu0 0
    %1434 = vmatmul.mubr.bf16.gmra.mrb[0].mxu0 %v1378
    %v1435 = vpop.f32.mrb[0].mxu0
    %v1436 = vadd.f32 0.0, %v1435
    %v1437 = vpop.f32.mrb[0].mxu0
    %v1438 = vpop.f32.mrb[0].mxu0
    %v1439 = vadd.f32 0.0, %v1438
    %v1440 = vpop.f32.mrb[0].mxu0
    %1441 = vmatprep.mubr.bf16.mxu0 0
    %1442 = vmatmul.mubr.bf16.gmra.mrb[0].mxu0 %v1381
    %v1443 = vpop.f32.mrb[0].mxu0
    %v1444 = vadd.f32 0.0, %v1443
    %v1445 = vpop.f32.mrb[0].mxu0
    %v1446 = vpop.f32.mrb[0].mxu0
    %v1447 = vadd.f32 0.0, %v1446
    %v1448 = vpop.f32.mrb[0].mxu0
    %1449 = vmatprep.mubr.bf16.mxu0 0
    %1450 = vmatmul.mubr.bf16.gmra.mrb[0].mxu0 %v1384
    %v1451 = vpop.f32.mrb[0].mxu0
    %v1452 = vadd.f32 0.0, %v1451
    %v1453 = vpop.f32.mrb[0].mxu0
    %v1454 = vpop.f32.mrb[0].mxu0
    %v1455 = vadd.f32 0.0, %v1454
    %v1456 = vpop.f32.mrb[0].mxu0
    %1457 = vmatprep.mubr.bf16.mxu0 0
    %1458 = vmatmul.mubr.bf16.gmra.mrb[0].mxu0 %v1387
    %v1459 = vpop.f32.mrb[0].mxu0
    %v1460 = vadd.f32 0.0, %v1459
    %v1461 = vpop.f32.mrb[0].mxu0
    %v1462 = vpop.f32.mrb[0].mxu0
    %v1463 = vadd.f32 0.0, %v1462
    %v1464 = vpop.f32.mrb[0].mxu0
    %1465 = vmatprep.mubr.bf16.mxu0 0
    %1466 = vmatmul.mubr.bf16.gmra.mrb[0].mxu0 %v1390
    %v1467 = vpop.f32.mrb[0].mxu0
    %v1468 = vadd.f32 0.0, %v1467
    %v1469 = vpop.f32.mrb[0].mxu0
    %v1470 = vpop.f32.mrb[0].mxu0
    %v1471 = vadd.f32 0.0, %v1470
    %v1472 = vpop.f32.mrb[0].mxu0
    %1473 = vmatprep.mubr.bf16.mxu0 0
    %1474 = vmatmul.mubr.bf16.gmra.mrb[0].mxu0 %v1393
    %v1475 = vpop.f32.mrb[0].mxu0
    %v1476 = vadd.f32 0.0, %v1475
    %v1477 = vpop.f32.mrb[0].mxu0
    %v1478 = vpop.f32.mrb[0].mxu0
    %v1479 = vadd.f32 0.0, %v1478
    %v1480 = vpop.f32.mrb[0].mxu0
    %1481 = vmatprep.mubr.bf16.mxu0 0
    %1482 = vmatmul.mubr.bf16.gmra.mrb[0].mxu0 %v1396
    %v1483 = vpop.f32.mrb[0].mxu0
    %v1484 = vadd.f32 0.0, %v1483
    %v1485 = vpop.f32.mrb[0].mxu0
    %v1486 = vpop.f32.mrb[0].mxu0
    %v1487 = vadd.f32 0.0, %v1486
    %v1488 = vpop.f32.mrb[0].mxu0
    %1489 = vmatprep.mubr.bf16.mxu0 0
    %1490 = vmatmul.mubr.bf16.gmra.mrb[0].mxu0 %v1399
    %v1491 = vpop.f32.mrb[0].mxu0
    %v1492 = vadd.f32 0.0, %v1491
    %v1493 = vpop.f32.mrb[0].mxu0
    %v1494 = vpop.f32.mrb[0].mxu0
    %v1495 = vadd.f32 0.0, %v1494
    %v1496 = vpop.f32.mrb[0].mxu0
    %1497 = vdwg.mxu0
    %v1498 = vadd.f32 %v1134, %v1436
    %v1499 = vadd.f32 %v1135, %v1439
    %v1500 = vadd.f32 %v1136, %v1444
    %v1501 = vadd.f32 %v1137, %v1447
    %v1502 = vadd.f32 %v1138, %v1452
    %v1503 = vadd.f32 %v1139, %v1455
    %v1504 = vadd.f32 %v1140, %v1460
    %v1505 = vadd.f32 %v1141, %v1463
    %v1506 = vadd.f32 %v1142, %v1468
    %v1507 = vadd.f32 %v1143, %v1471
    %v1508 = vadd.f32 %v1144, %v1476
    %v1509 = vadd.f32 %v1145, %v1479
    %v1510 = vadd.f32 %v1146, %v1484
    %v1511 = vadd.f32 %v1147, %v1487
    %v1512 = vadd.f32 %v1148, %v1492
    %v1513 = vadd.f32 %v1149, %v1495
    %s1514 = scalar_lea.vmem %s0, 512
    %v1515 = vld [vmem:[%s1514] sm:$0xff]
    %v1516 = vld [vmem:[%s1514 + $0x8] sm:$0xff]
    %v1517 = vld [vmem:[%s1514 + $0x10] sm:$0xff]
    %v1518 = vld [vmem:[%s1514 + $0x18] sm:$0xff]
    %v1519 = vld [vmem:[%s1514 + $0x20] sm:$0xff]
    %v1520 = vld [vmem:[%s1514 + $0x28] sm:$0xff]
    %v1521 = vld [vmem:[%s1514 + $0x30] sm:$0xff]
    %v1522 = vld [vmem:[%s1514 + $0x38] sm:$0xff]
    %v1523 = vld [vmem:[%s1514 + $0x40] sm:$0xff]
    %v1524 = vld [vmem:[%s1514 + $0x48] sm:$0xff]
    %v1525 = vld [vmem:[%s1514 + $0x50] sm:$0xff]
    %v1526 = vld [vmem:[%s1514 + $0x58] sm:$0xff]
    %v1527 = vld [vmem:[%s1514 + $0x60] sm:$0xff]
    %v1528 = vld [vmem:[%s1514 + $0x68] sm:$0xff]
    %v1529 = vld [vmem:[%s1514 + $0x70] sm:$0xff]
    %v1530 = vld [vmem:[%s1514 + $0x78] sm:$0xff]
    %1531 = vset.pattern.permute.xlu0 0
    %1532 = vperm.xlu0 %1531, %v1515
    %v1533 = vpop.permute.xlu0 %1532
    %1534 = vset.pattern.permute.xlu0 0
    %1535 = vperm.xlu0 %1534, %v1516
    %v1536 = vpop.permute.xlu0 %1535
    %1537 = vset.pattern.permute.xlu0 0
    %1538 = vperm.xlu0 %1537, %v1517
    %v1539 = vpop.permute.xlu0 %1538
    %1540 = vset.pattern.permute.xlu0 0
    %1541 = vperm.xlu0 %1540, %v1518
    %v1542 = vpop.permute.xlu0 %1541
    %1543 = vset.pattern.permute.xlu0 0
    %1544 = vperm.xlu0 %1543, %v1519
    %v1545 = vpop.permute.xlu0 %1544
    %1546 = vset.pattern.permute.xlu0 0
    %1547 = vperm.xlu0 %1546, %v1520
    %v1548 = vpop.permute.xlu0 %1547
    %1549 = vset.pattern.permute.xlu0 0
    %1550 = vperm.xlu0 %1549, %v1521
    %v1551 = vpop.permute.xlu0 %1550
    %1552 = vset.pattern.permute.xlu0 0
    %1553 = vperm.xlu0 %1552, %v1522
    %v1554 = vpop.permute.xlu0 %1553
    %1555 = vset.pattern.permute.xlu0 0
    %1556 = vperm.xlu0 %1555, %v1523
    %v1557 = vpop.permute.xlu0 %1556
    %1558 = vset.pattern.permute.xlu0 0
    %1559 = vperm.xlu0 %1558, %v1524
    %v1560 = vpop.permute.xlu0 %1559
    %1561 = vset.pattern.permute.xlu0 0
    %1562 = vperm.xlu0 %1561, %v1525
    %v1563 = vpop.permute.xlu0 %1562
    %1564 = vset.pattern.permute.xlu0 0
    %1565 = vperm.xlu0 %1564, %v1526
    %v1566 = vpop.permute.xlu0 %1565
    %1567 = vset.pattern.permute.xlu0 0
    %1568 = vperm.xlu0 %1567, %v1527
    %v1569 = vpop.permute.xlu0 %1568
    %1570 = vset.pattern.permute.xlu0 0
    %1571 = vperm.xlu0 %1570, %v1528
    %v1572 = vpop.permute.xlu0 %1571
    %1573 = vset.pattern.permute.xlu0 0
    %1574 = vperm.xlu0 %1573, %v1529
    %v1575 = vpop.permute.xlu0 %1574
    %1576 = vset.pattern.permute.xlu0 0
    %1577 = vperm.xlu0 %1576, %v1530
    %v1578 = vpop.permute.xlu0 %1577
    %vm1579 = vcmp.eq.s32.totalorder %v42, %v1533
    %vm1580 = vcmp.eq.s32.totalorder %v42, %v1536
    %vm1581 = vcmp.eq.s32.totalorder %v42, %v1539
    %vm1582 = vcmp.eq.s32.totalorder %v42, %v1542
    %vm1583 = vcmp.eq.s32.totalorder %v42, %v1545
    %vm1584 = vcmp.eq.s32.totalorder %v42, %v1548
    %vm1585 = vcmp.eq.s32.totalorder %v42, %v1551
    %vm1586 = vcmp.eq.s32.totalorder %v42, %v1554
    %vm1587 = vcmp.eq.s32.totalorder %v42, %v1557
    %vm1588 = vcmp.eq.s32.totalorder %v42, %v1560
    %vm1589 = vcmp.eq.s32.totalorder %v42, %v1563
    %vm1590 = vcmp.eq.s32.totalorder %v42, %v1566
    %vm1591 = vcmp.eq.s32.totalorder %v42, %v1569
    %vm1592 = vcmp.eq.s32.totalorder %v42, %v1572
    %vm1593 = vcmp.eq.s32.totalorder %v42, %v1575
    %vm1594 = vcmp.eq.s32.totalorder %v42, %v1578
    %v1595 = vsel %vm1579, 1.0, 0.0
    %v1596 = vsel %vm1580, 1.0, 0.0
    %v1597 = vsel %vm1581, 1.0, 0.0
    %v1598 = vsel %vm1582, 1.0, 0.0
    %v1599 = vsel %vm1583, 1.0, 0.0
    %v1600 = vsel %vm1584, 1.0, 0.0
    %v1601 = vsel %vm1585, 1.0, 0.0
    %v1602 = vsel %vm1586, 1.0, 0.0
    %v1603 = vsel %vm1587, 1.0, 0.0
    %v1604 = vsel %vm1588, 1.0, 0.0
    %v1605 = vsel %vm1589, 1.0, 0.0
    %v1606 = vsel %vm1590, 1.0, 0.0
    %v1607 = vsel %vm1591, 1.0, 0.0
    %v1608 = vsel %vm1592, 1.0, 0.0
    %v1609 = vsel %vm1593, 1.0, 0.0
    %v1610 = vsel %vm1594, 1.0, 0.0
    %v1611 = vpack.c.bf16 %v1596, %v1595
    %v1612 = vpack.c.bf16 %v1598, %v1597
    %v1613 = vpack.c.bf16 %v1600, %v1599
    %v1614 = vpack.c.bf16 %v1602, %v1601
    %v1615 = vpack.c.bf16 %v1604, %v1603
    %v1616 = vpack.c.bf16 %v1606, %v1605
    %v1617 = vpack.c.bf16 %v1608, %v1607
    %v1618 = vpack.c.bf16 %v1610, %v1609
    %1619 = vmatprep.subr.bf16.mxu0 0
    %1620 = vmatpush1.bf16.msra.mxu0 %v179
    %1621 = vmatprep.subr.bf16.mxu0 0
    %1622 = vmatpush1.bf16.msra.mxu0 %v180
    %1623 = vmatprep.subr.bf16.mxu0 0
    %1624 = vmatpush1.bf16.msra.mxu0 %v181
    %1625 = vmatprep.subr.bf16.mxu0 0
    %1626 = vmatpush1.bf16.msra.mxu0 %v182
    %1627 = vmatprep.subr.bf16.mxu0 0
    %1628 = vmatpush1.bf16.msra.mxu0 %v183
    %1629 = vmatprep.subr.bf16.mxu0 0
    %1630 = vmatpush1.bf16.msra.mxu0 %v184
    %1631 = vmatprep.subr.bf16.mxu0 0
    %1632 = vmatpush1.bf16.msra.mxu0 %v185
    %1633 = vmatprep.subr.bf16.mxu0 0
    %1634 = vmatpush1.bf16.msra.mxu0 %v186
    %1635 = vmatprep.subr.bf16.mxu0 0
    %1636 = vmatpush1.bf16.msra.mxu0 0
    %1637 = vmatprep.subr.bf16.mxu0 0
    %1638 = vmatpush1.bf16.msra.mxu0 0
    %1639 = vmatprep.subr.bf16.mxu0 0
    %1640 = vmatpush1.bf16.msra.mxu0 0
    %1641 = vmatprep.subr.bf16.mxu0 0
    %1642 = vmatpush1.bf16.msra.mxu0 0
    %1643 = vmatprep.subr.bf16.mxu0 0
    %1644 = vmatpush1.bf16.msra.mxu0 0
    %1645 = vmatprep.subr.bf16.mxu0 0
    %1646 = vmatpush1.bf16.msra.mxu0 0
    %1647 = vmatprep.subr.bf16.mxu0 0
    %1648 = vmatpush1.bf16.msra.mxu0 0
    %1649 = vmatprep.subr.bf16.mxu0 0
    %1650 = vmatpush1.bf16.msra.mxu0 0
    %1651 = vmatprep.mubr.bf16.mxu0 0
    %1652 = vmatmul.mubr.bf16.gmra.mrb[0].mxu0 %v1611
    %v1653 = vpop.f32.mrb[0].mxu0
    %v1654 = vadd.f32 0.0, %v1653
    %v1655 = vpop.f32.mrb[0].mxu0
    %v1656 = vpop.f32.mrb[0].mxu0
    %v1657 = vadd.f32 0.0, %v1656
    %v1658 = vpop.f32.mrb[0].mxu0
    %1659 = vmatprep.mubr.bf16.mxu0 0
    %1660 = vmatmul.mubr.bf16.gmra.mrb[0].mxu0 %v1612
    %v1661 = vpop.f32.mrb[0].mxu0
    %v1662 = vadd.f32 0.0, %v1661
    %v1663 = vpop.f32.mrb[0].mxu0
    %v1664 = vpop.f32.mrb[0].mxu0
    %v1665 = vadd.f32 0.0, %v1664
    %v1666 = vpop.f32.mrb[0].mxu0
    %1667 = vmatprep.mubr.bf16.mxu0 0
    %1668 = vmatmul.mubr.bf16.gmra.mrb[0].mxu0 %v1613
    %v1669 = vpop.f32.mrb[0].mxu0
    %v1670 = vadd.f32 0.0, %v1669
    %v1671 = vpop.f32.mrb[0].mxu0
    %v1672 = vpop.f32.mrb[0].mxu0
    %v1673 = vadd.f32 0.0, %v1672
    %v1674 = vpop.f32.mrb[0].mxu0
    %1675 = vmatprep.mubr.bf16.mxu0 0
    %1676 = vmatmul.mubr.bf16.gmra.mrb[0].mxu0 %v1614
    %v1677 = vpop.f32.mrb[0].mxu0
    %v1678 = vadd.f32 0.0, %v1677
    %v1679 = vpop.f32.mrb[0].mxu0
    %v1680 = vpop.f32.mrb[0].mxu0
    %v1681 = vadd.f32 0.0, %v1680
    %v1682 = vpop.f32.mrb[0].mxu0
    %1683 = vmatprep.mubr.bf16.mxu0 0
    %1684 = vmatmul.mubr.bf16.gmra.mrb[0].mxu0 %v1615
    %v1685 = vpop.f32.mrb[0].mxu0
    %v1686 = vadd.f32 0.0, %v1685
    %v1687 = vpop.f32.mrb[0].mxu0
    %v1688 = vpop.f32.mrb[0].mxu0
    %v1689 = vadd.f32 0.0, %v1688
    %v1690 = vpop.f32.mrb[0].mxu0
    %1691 = vmatprep.mubr.bf16.mxu0 0
    %1692 = vmatmul.mubr.bf16.gmra.mrb[0].mxu0 %v1616
    %v1693 = vpop.f32.mrb[0].mxu0
    %v1694 = vadd.f32 0.0, %v1693
    %v1695 = vpop.f32.mrb[0].mxu0
    %v1696 = vpop.f32.mrb[0].mxu0
    %v1697 = vadd.f32 0.0, %v1696
    %v1698 = vpop.f32.mrb[0].mxu0
    %1699 = vmatprep.mubr.bf16.mxu0 0
    %1700 = vmatmul.mubr.bf16.gmra.mrb[0].mxu0 %v1617
    %v1701 = vpop.f32.mrb[0].mxu0
    %v1702 = vadd.f32 0.0, %v1701
    %v1703 = vpop.f32.mrb[0].mxu0
    %v1704 = vpop.f32.mrb[0].mxu0
    %v1705 = vadd.f32 0.0, %v1704
    %v1706 = vpop.f32.mrb[0].mxu0
    %1707 = vmatprep.mubr.bf16.mxu0 0
    %1708 = vmatmul.mubr.bf16.gmra.mrb[0].mxu0 %v1618
    %v1709 = vpop.f32.mrb[0].mxu0
    %v1710 = vadd.f32 0.0, %v1709
    %v1711 = vpop.f32.mrb[0].mxu0
    %v1712 = vpop.f32.mrb[0].mxu0
    %v1713 = vadd.f32 0.0, %v1712
    %v1714 = vpop.f32.mrb[0].mxu0
    %1715 = vdwg.mxu0
    %v1716 = vpack.c.bf16 %v1657, %v1654
    %v1717 = vpack.c.bf16 %v1665, %v1662
    %v1718 = vpack.c.bf16 %v1673, %v1670
    %v1719 = vpack.c.bf16 %v1681, %v1678
    %v1720 = vpack.c.bf16 %v1689, %v1686
    %v1721 = vpack.c.bf16 %v1697, %v1694
    %v1722 = vpack.c.bf16 %v1705, %v1702
    %v1723 = vpack.c.bf16 %v1713, %v1710
    %s1724 = scalar_lea.vmem %s2, 64
    %v1725 = vld [vmem:[%s1724] sm:$0xf]
    %v1726 = vld [vmem:[%s1724 + $0x4] sm:$0xf]
    %v1727 = vld [vmem:[%s1724 + $0x8] sm:$0xf]
    %v1728 = vld [vmem:[%s1724 + $0xc] sm:$0xf]
    %v1733 = vunpack.c.l.b16 %v1725
    %v1734 = vunpack.c.l.b16 %v1726
    %v1735 = vunpack.c.l.b16 %v1727
    %v1736 = vunpack.c.l.b16 %v1728
    %v1737 = vpack.c.b16 %v1734, %v1733
    %v1738 = vpack.c.b16 %v1736, %v1735
    %v1742 = vsel %vm531, %v1716, 0
    %v1745 = vsel %vm531, %v1717, 0
    %v1748 = vsel %vm531, %v1718, 0
    %v1751 = vsel %vm531, %v1719, 0
    %v1754 = vsel %vm531, %v1720, 0
    %v1757 = vsel %vm531, %v1721, 0
    %v1760 = vsel %vm531, %v1722, 0
    %v1763 = vsel %vm531, %v1723, 0
    %1765 = vmatprep.subr.bf16.mxu0 0
    %1766 = vmatpush1.bf16.msra.mxu0 %v1737
    %1767 = vmatprep.subr.bf16.mxu0 0
    %1768 = vmatpush1.bf16.msra.mxu0 %v1738
    %1769 = vmatprep.subr.bf16.mxu0 0
    %1770 = vmatpush1.bf16.msra.mxu0 0
    %1771 = vmatprep.subr.bf16.mxu0 0
    %1772 = vmatpush1.bf16.msra.mxu0 0
    %1773 = vmatprep.subr.bf16.mxu0 0
    %1774 = vmatpush1.bf16.msra.mxu0 0
    %1775 = vmatprep.subr.bf16.mxu0 0
    %1776 = vmatpush1.bf16.msra.mxu0 0
    %1777 = vmatprep.subr.bf16.mxu0 0
    %1778 = vmatpush1.bf16.msra.mxu0 0
    %1779 = vmatprep.subr.bf16.mxu0 0
    %1780 = vmatpush1.bf16.msra.mxu0 0
    %1781 = vmatprep.subr.bf16.mxu0 0
    %1782 = vmatpush1.bf16.msra.mxu0 0
    %1783 = vmatprep.subr.bf16.mxu0 0
    %1784 = vmatpush1.bf16.msra.mxu0 0
    %1785 = vmatprep.subr.bf16.mxu0 0
    %1786 = vmatpush1.bf16.msra.mxu0 0
    %1787 = vmatprep.subr.bf16.mxu0 0
    %1788 = vmatpush1.bf16.msra.mxu0 0
    %1789 = vmatprep.subr.bf16.mxu0 0
    %1790 = vmatpush1.bf16.msra.mxu0 0
    %1791 = vmatprep.subr.bf16.mxu0 0
    %1792 = vmatpush1.bf16.msra.mxu0 0
    %1793 = vmatprep.subr.bf16.mxu0 0
    %1794 = vmatpush1.bf16.msra.mxu0 0
    %1795 = vmatprep.subr.bf16.mxu0 0
    %1796 = vmatpush1.bf16.msra.mxu0 0
    %1797 = vmatprep.mubr.bf16.mxu0 0
    %1798 = vmatmul.mubr.bf16.gmra.mrb[0].mxu0 %v1742
    %v1799 = vpop.f32.mrb[0].mxu0
    %v1800 = vadd.f32 0.0, %v1799
    %v1801 = vpop.f32.mrb[0].mxu0
    %v1802 = vpop.f32.mrb[0].mxu0
    %v1803 = vadd.f32 0.0, %v1802
    %v1804 = vpop.f32.mrb[0].mxu0
    %1805 = vmatprep.mubr.bf16.mxu0 0
    %1806 = vmatmul.mubr.bf16.gmra.mrb[0].mxu0 %v1745
    %v1807 = vpop.f32.mrb[0].mxu0
    %v1808 = vadd.f32 0.0, %v1807
    %v1809 = vpop.f32.mrb[0].mxu0
    %v1810 = vpop.f32.mrb[0].mxu0
    %v1811 = vadd.f32 0.0, %v1810
    %v1812 = vpop.f32.mrb[0].mxu0
    %1813 = vmatprep.mubr.bf16.mxu0 0
    %1814 = vmatmul.mubr.bf16.gmra.mrb[0].mxu0 %v1748
    %v1815 = vpop.f32.mrb[0].mxu0
    %v1816 = vadd.f32 0.0, %v1815
    %v1817 = vpop.f32.mrb[0].mxu0
    %v1818 = vpop.f32.mrb[0].mxu0
    %v1819 = vadd.f32 0.0, %v1818
    %v1820 = vpop.f32.mrb[0].mxu0
    %1821 = vmatprep.mubr.bf16.mxu0 0
    %1822 = vmatmul.mubr.bf16.gmra.mrb[0].mxu0 %v1751
    %v1823 = vpop.f32.mrb[0].mxu0
    %v1824 = vadd.f32 0.0, %v1823
    %v1825 = vpop.f32.mrb[0].mxu0
    %v1826 = vpop.f32.mrb[0].mxu0
    %v1827 = vadd.f32 0.0, %v1826
    %v1828 = vpop.f32.mrb[0].mxu0
    %1829 = vmatprep.mubr.bf16.mxu0 0
    %1830 = vmatmul.mubr.bf16.gmra.mrb[0].mxu0 %v1754
    %v1831 = vpop.f32.mrb[0].mxu0
    %v1832 = vadd.f32 0.0, %v1831
    %v1833 = vpop.f32.mrb[0].mxu0
    %v1834 = vpop.f32.mrb[0].mxu0
    %v1835 = vadd.f32 0.0, %v1834
    %v1836 = vpop.f32.mrb[0].mxu0
    %1837 = vmatprep.mubr.bf16.mxu0 0
    %1838 = vmatmul.mubr.bf16.gmra.mrb[0].mxu0 %v1757
    %v1839 = vpop.f32.mrb[0].mxu0
    %v1840 = vadd.f32 0.0, %v1839
    %v1841 = vpop.f32.mrb[0].mxu0
    %v1842 = vpop.f32.mrb[0].mxu0
    %v1843 = vadd.f32 0.0, %v1842
    %v1844 = vpop.f32.mrb[0].mxu0
    %1845 = vmatprep.mubr.bf16.mxu0 0
    %1846 = vmatmul.mubr.bf16.gmra.mrb[0].mxu0 %v1760
    %v1847 = vpop.f32.mrb[0].mxu0
    %v1848 = vadd.f32 0.0, %v1847
    %v1849 = vpop.f32.mrb[0].mxu0
    %v1850 = vpop.f32.mrb[0].mxu0
    %v1851 = vadd.f32 0.0, %v1850
    %v1852 = vpop.f32.mrb[0].mxu0
    %1853 = vmatprep.mubr.bf16.mxu0 0
    %1854 = vmatmul.mubr.bf16.gmra.mrb[0].mxu0 %v1763
    %v1855 = vpop.f32.mrb[0].mxu0
    %v1856 = vadd.f32 0.0, %v1855
    %v1857 = vpop.f32.mrb[0].mxu0
    %v1858 = vpop.f32.mrb[0].mxu0
    %v1859 = vadd.f32 0.0, %v1858
    %v1860 = vpop.f32.mrb[0].mxu0
    %1861 = vdwg.mxu0
    %v1862 = vadd.f32 %v1498, %v1800
    %v1863 = vadd.f32 %v1499, %v1803
    %v1864 = vadd.f32 %v1500, %v1808
    %v1865 = vadd.f32 %v1501, %v1811
    %v1866 = vadd.f32 %v1502, %v1816
    %v1867 = vadd.f32 %v1503, %v1819
    %v1868 = vadd.f32 %v1504, %v1824
    %v1869 = vadd.f32 %v1505, %v1827
    %v1870 = vadd.f32 %v1506, %v1832
    %v1871 = vadd.f32 %v1507, %v1835
    %v1872 = vadd.f32 %v1508, %v1840
    %v1873 = vadd.f32 %v1509, %v1843
    %v1874 = vadd.f32 %v1510, %v1848
    %v1875 = vadd.f32 %v1511, %v1851
    %v1876 = vadd.f32 %v1512, %v1856
    %v1877 = vadd.f32 %v1513, %v1859
    %v1878 = vld [vmem:[%s3] sm:$0x1]
    %v1880 = vlaneseq
    %v1881 = vshrl.u32 %v1880, 7
    %v1882 = vsub.s32 0, %v1881
    %v1883 = vrot.slane %v1878, %v1882
    %v1885 = vadd.f32 %v1862, %v1883
    %v1886 = vadd.f32 %v1863, %v1883
    %v1887 = vadd.f32 %v1864, %v1883
    %v1888 = vadd.f32 %v1865, %v1883
    %v1889 = vadd.f32 %v1866, %v1883
    %v1890 = vadd.f32 %v1867, %v1883
    %v1891 = vadd.f32 %v1868, %v1883
    %v1892 = vadd.f32 %v1869, %v1883
    %v1893 = vadd.f32 %v1870, %v1883
    %v1894 = vadd.f32 %v1871, %v1883
    %v1895 = vadd.f32 %v1872, %v1883
    %v1896 = vadd.f32 %v1873, %v1883
    %v1897 = vadd.f32 %v1874, %v1883
    %v1898 = vadd.f32 %v1875, %v1883
    %v1899 = vadd.f32 %v1876, %v1883
    %v1900 = vadd.f32 %v1877, %v1883
    %v1901 = vmax.f32 %v1885, 0.0
    %v1902 = vmax.f32 %v1886, 0.0
    %v1903 = vmax.f32 %v1887, 0.0
    %v1904 = vmax.f32 %v1888, 0.0
    %v1905 = vmax.f32 %v1889, 0.0
    %v1906 = vmax.f32 %v1890, 0.0
    %v1907 = vmax.f32 %v1891, 0.0
    %v1908 = vmax.f32 %v1892, 0.0
    %v1909 = vmax.f32 %v1893, 0.0
    %v1910 = vmax.f32 %v1894, 0.0
    %v1911 = vmax.f32 %v1895, 0.0
    %v1912 = vmax.f32 %v1896, 0.0
    %v1913 = vmax.f32 %v1897, 0.0
    %v1914 = vmax.f32 %v1898, 0.0
    %v1915 = vmax.f32 %v1899, 0.0
    %v1916 = vmax.f32 %v1900, 0.0
    %v1917 = vlaneseq
    %v1918 = vshrl.u32 %v1917, 7
    %v1919 = vadd.s32 %v1918, 8
    %vm1920 = vcmp.ge.s32.totalorder %v42, 0
    %vm1921 = vcmp.lt.s32.totalorder %v42, 16
    %vm1922 = vmand %vm1920, %vm1921
    %vm1923 = vcmp.lt.s32.totalorder %v1918, 14
    %vm1924 = vcmp.lt.s32.totalorder %v1919, 14
    %vm1925 = vmand %vm1922, %vm1923
    %vm1926 = vmand %vm1922, %vm1924
    %vm1927 = vcmp.ge.s32.totalorder %v42, 16
    %vm1928 = vcmp.lt.s32.totalorder %v42, 32
    %vm1929 = vmand %vm1927, %vm1928
    %vm1930 = vcmp.lt.s32.totalorder %v1918, 13
    %vm1931 = vcmp.lt.s32.totalorder %v1919, 13
    %vm1932 = vmand %vm1929, %vm1930
    %vm1933 = vmand %vm1929, %vm1931
    %vm1934 = vmor %vm1925, %vm1932
    %vm1935 = vmor %vm1926, %vm1933
    %vm1936 = vcmp.ge.s32.totalorder %v42, 32
    %vm1937 = vcmp.lt.s32.totalorder %v42, 48
    %vm1938 = vmand %vm1936, %vm1937
    %vm1939 = vcmp.lt.s32.totalorder %v1918, 12
    %vm1940 = vcmp.lt.s32.totalorder %v1919, 12
    %vm1941 = vmand %vm1938, %vm1939
    %vm1942 = vmand %vm1938, %vm1940
    %vm1943 = vmor %vm1934, %vm1941
    %vm1944 = vmor %vm1935, %vm1942
    %v1945 = vsel %vm1943, 1.0, 0.0
    %v1946 = vsel %vm1944, 1.0, 0.0
    %v1947 = vmul.f32 %v1901, %v1945
    %v1948 = vmul.f32 %v1902, %v1946
    %v1949 = vmul.f32 %v1903, %v1945
    %v1950 = vmul.f32 %v1904, %v1946
    %v1951 = vmul.f32 %v1905, %v1945
    %v1952 = vmul.f32 %v1906, %v1946
    %v1953 = vmul.f32 %v1907, %v1945
    %v1954 = vmul.f32 %v1908, %v1946
    %v1955 = vmul.f32 %v1909, %v1945
    %v1956 = vmul.f32 %v1910, %v1946
    %v1957 = vmul.f32 %v1911, %v1945
    %v1958 = vmul.f32 %v1912, %v1946
    %v1959 = vmul.f32 %v1913, %v1945
    %v1960 = vmul.f32 %v1914, %v1946
    %v1961 = vmul.f32 %v1915, %v1945
    %v1962 = vmul.f32 %v1916, %v1946
    %vm1963 = vcmask 392192
    %v1964 = vsel %vm1963, %v1947, -inf
    %v1965 = vsel %vm1963, %v1948, -inf
    %v1966 = vmax.f32 %v1964, %v1965
    %v1967 = vrot.slane %v1966, 4
    %v1968 = vmax.f32 %v1966, %v1967
    %v1969 = vrot.slane %v1968, 2
    %v1970 = vmax.f32 %v1968, %v1969
    %v1971 = vrot.slane %v1970, 1
    %v1972 = vmax.f32 %v1970, %v1971
    %v1973 = vsel %vm1963, %v1949, -inf
    %v1974 = vsel %vm1963, %v1950, -inf
    %v1975 = vmax.f32 %v1973, %v1974
    %v1976 = vrot.slane %v1975, 4
    %v1977 = vmax.f32 %v1975, %v1976
    %v1978 = vrot.slane %v1977, 2
    %v1979 = vmax.f32 %v1977, %v1978
    %v1980 = vrot.slane %v1979, 1
    %v1981 = vmax.f32 %v1979, %v1980
    %v1982 = vsel %vm1963, %v1951, -inf
    %v1983 = vsel %vm1963, %v1952, -inf
    %v1984 = vmax.f32 %v1982, %v1983
    %v1985 = vrot.slane %v1984, 4
    %v1986 = vmax.f32 %v1984, %v1985
    %v1987 = vrot.slane %v1986, 2
    %v1988 = vmax.f32 %v1986, %v1987
    %v1989 = vrot.slane %v1988, 1
    %v1990 = vmax.f32 %v1988, %v1989
    %v1991 = vsel %vm1963, %v1953, -inf
    %v1992 = vsel %vm1963, %v1954, -inf
    %v1993 = vmax.f32 %v1991, %v1992
    %v1994 = vrot.slane %v1993, 4
    %v1995 = vmax.f32 %v1993, %v1994
    %v1996 = vrot.slane %v1995, 2
    %v1997 = vmax.f32 %v1995, %v1996
    %v1998 = vrot.slane %v1997, 1
    %v1999 = vmax.f32 %v1997, %v1998
    %v2000 = vsel %vm1963, %v1955, -inf
    %v2001 = vsel %vm1963, %v1956, -inf
    %v2002 = vmax.f32 %v2000, %v2001
    %v2003 = vrot.slane %v2002, 4
    %v2004 = vmax.f32 %v2002, %v2003
    %v2005 = vrot.slane %v2004, 2
    %v2006 = vmax.f32 %v2004, %v2005
    %v2007 = vrot.slane %v2006, 1
    %v2008 = vmax.f32 %v2006, %v2007
    %v2009 = vsel %vm1963, %v1957, -inf
    %v2010 = vsel %vm1963, %v1958, -inf
    %v2011 = vmax.f32 %v2009, %v2010
    %v2012 = vrot.slane %v2011, 4
    %v2013 = vmax.f32 %v2011, %v2012
    %v2014 = vrot.slane %v2013, 2
    %v2015 = vmax.f32 %v2013, %v2014
    %v2016 = vrot.slane %v2015, 1
    %v2017 = vmax.f32 %v2015, %v2016
    %v2018 = vsel %vm1963, %v1959, -inf
    %v2019 = vsel %vm1963, %v1960, -inf
    %v2020 = vmax.f32 %v2018, %v2019
    %v2021 = vrot.slane %v2020, 4
    %v2022 = vmax.f32 %v2020, %v2021
    %v2023 = vrot.slane %v2022, 2
    %v2024 = vmax.f32 %v2022, %v2023
    %v2025 = vrot.slane %v2024, 1
    %v2026 = vmax.f32 %v2024, %v2025
    %v2027 = vsel %vm1963, %v1961, -inf
    %v2028 = vsel %vm1963, %v1962, -inf
    %v2029 = vmax.f32 %v2027, %v2028
    %v2030 = vrot.slane %v2029, 4
    %v2031 = vmax.f32 %v2029, %v2030
    %v2032 = vrot.slane %v2031, 2
    %v2033 = vmax.f32 %v2031, %v2032
    %v2034 = vrot.slane %v2033, 1
    %v2035 = vmax.f32 %v2033, %v2034
    %v2036 = vpack.c.bf16 %v1972, %v1972
    %v2037 = vpack.c.bf16 %v1981, %v1981
    %v2038 = vpack.c.bf16 %v1990, %v1990
    %v2039 = vpack.c.bf16 %v1999, %v1999
    %v2040 = vpack.c.bf16 %v2008, %v2008
    %v2041 = vpack.c.bf16 %v2017, %v2017
    %v2042 = vpack.c.bf16 %v2026, %v2026
    %v2043 = vpack.c.bf16 %v2035, %v2035
    %v2044 = vld [vmem:[%s4] sm:$0xf]
    %v2045 = vld [vmem:[%s4 + $0x4] sm:$0xf]
    %v2046 = vld [vmem:[%s4 + $0x8] sm:$0xf]
    %v2047 = vld [vmem:[%s4 + $0xc] sm:$0xf]
    %v2048 = vld [vmem:[%s4 + $0x10] sm:$0xf]
    %v2049 = vld [vmem:[%s4 + $0x14] sm:$0xf]
    %v2050 = vld [vmem:[%s5] sm:$0x1]
    %v2052 = vlaneseq
    %v2053 = vshrl.u32 %v2052, 7
    %v2054 = vsub.s32 0, %v2053
    %v2055 = vrot.slane %v2050, %v2054
    %v2065 = vunpack.c.l.b16 %v2036
    %v2066 = vunpack.c.l.b16 %v2037
    %v2067 = vunpack.c.l.b16 %v2038
    %v2068 = vunpack.c.l.b16 %v2039
    %v2069 = vunpack.c.l.b16 %v2040
    %v2070 = vunpack.c.l.b16 %v2041
    %v2071 = vunpack.c.l.b16 %v2042
    %v2072 = vunpack.c.l.b16 %v2043
    %vm2073 = vcmask 1041409
    %v2074 = vsel %vm2073, %v2066, %v2065
    %vm2075 = vcmask 1042434
    %v2076 = vsel %vm2075, %v2067, %v2074
    %vm2077 = vcmask 1043459
    %v2078 = vsel %vm2077, %v2068, %v2076
    %vm2079 = vcmask 1044484
    %v2080 = vsel %vm2079, %v2069, %v2078
    %vm2081 = vcmask 1045509
    %v2082 = vsel %vm2081, %v2070, %v2080
    %vm2083 = vcmask 1046534
    %v2084 = vsel %vm2083, %v2071, %v2082
    %vm2085 = vcmask 1047559
    %v2086 = vsel %vm2085, %v2072, %v2084
    %v2087 = vpack.c.b16 %v2086, %v2086
    %v2094 = vunpack.c.l.b16 %v2044
    %v2095 = vunpack.c.l.b16 %v2045
    %v2096 = vunpack.c.l.b16 %v2046
    %v2097 = vunpack.c.l.b16 %v2047
    %v2098 = vunpack.c.l.b16 %v2048
    %v2099 = vunpack.c.l.b16 %v2049
    %v2100 = vpack.c.b16 %v2095, %v2094
    %v2101 = vpack.c.b16 %v2097, %v2096
    %v2102 = vpack.c.b16 %v2099, %v2098
    %v2107 = vsel %vm1963, %v2087, 0
    %2109 = vmatprep.subr.bf16.mxu0 0
    %2110 = vmatpush1.bf16.msra.mxu0 %v2100
    %2111 = vmatprep.subr.bf16.mxu0 0
    %2112 = vmatpush1.bf16.msra.mxu0 %v2101
    %2113 = vmatprep.subr.bf16.mxu0 0
    %2114 = vmatpush1.bf16.msra.mxu0 %v2102
    %2115 = vmatprep.subr.bf16.mxu0 0
    %2116 = vmatpush1.bf16.msra.mxu0 0
    %2117 = vmatprep.subr.bf16.mxu0 0
    %2118 = vmatpush1.bf16.msra.mxu0 0
    %2119 = vmatprep.subr.bf16.mxu0 0
    %2120 = vmatpush1.bf16.msra.mxu0 0
    %2121 = vmatprep.subr.bf16.mxu0 0
    %2122 = vmatpush1.bf16.msra.mxu0 0
    %2123 = vmatprep.subr.bf16.mxu0 0
    %2124 = vmatpush1.bf16.msra.mxu0 0
    %2125 = vmatprep.subr.bf16.mxu0 0
    %2126 = vmatpush1.bf16.msra.mxu0 0
    %2127 = vmatprep.subr.bf16.mxu0 0
    %2128 = vmatpush1.bf16.msra.mxu0 0
    %2129 = vmatprep.subr.bf16.mxu0 0
    %2130 = vmatpush1.bf16.msra.mxu0 0
    %2131 = vmatprep.subr.bf16.mxu0 0
    %2132 = vmatpush1.bf16.msra.mxu0 0
    %2133 = vmatprep.subr.bf16.mxu0 0
    %2134 = vmatpush1.bf16.msra.mxu0 0
    %2135 = vmatprep.subr.bf16.mxu0 0
    %2136 = vmatpush1.bf16.msra.mxu0 0
    %2137 = vmatprep.subr.bf16.mxu0 0
    %2138 = vmatpush1.bf16.msra.mxu0 0
    %2139 = vmatprep.subr.bf16.mxu0 0
    %2140 = vmatpush1.bf16.msra.mxu0 0
    %2141 = vmatprep.mubr.bf16.mxu0 0
    %2142 = vmatmul.mubr.bf16.gmra.mrb[0].mxu0 %v2107
    %v2143 = vpop.f32.mrb[0].mxu0
    %v2144 = vadd.f32 %v2055, %v2143
    %v2145 = vpop.f32.mrb[0].mxu0
    %v2146 = vpop.f32.mrb[0].mxu0
    %v2147 = vpop.f32.mrb[0].mxu0
    %2148 = vdwg.mxu0
    %2149 = vst [vmem:[#allocation2] sm:$0xff] %v2144
    // Predicated region
    $region26: #{tpu_custom_call.1} parent=1 // pred_check
      _
    $region27: #{tpu_custom_call.1} parent=1 // pred_check_branch
      %2151 = sbr.rel (0) target = $region29
    $region28: #{tpu_custom_call.1} parent=1 // pred_region
      %s2153 = ssub.s32 128, 128
      %2154 = vsyncadd [#allocation3], %s2153
      %s2156 = sshll.u32 [#allocation2], 4
      %s2157 = int_to_ptr.vmem [resolvable:$true] %s2156
      %2159 = dma.vmem_to_hbm [thread:$0]  %s2157, 128, %s6, [#allocation3]
    $region29: #{tpu_custom_call.1} parent=1 // pred_fallthru
      _
    // Predicated region
    $region30: #{tpu_custom_call.1} parent=1 // pred_check
      _
    $region31: #{tpu_custom_call.1} parent=1 // pred_check_branch
      %2161 = sbr.rel (0) target = $region33
    $region32: #{tpu_custom_call.1} parent=1 // pred_region
      %2162 = dma.done [#allocation3], 128
    $region33: #{tpu_custom_call.1} parent=1 // pred_fallthru
      _
    %2163 = vsyncpa [#allocation3], 1

</llo_original>
